<compile_context>
chip_gen: v6e
topology: v6e:2x2x1
jax: 0.10.0
libtpu: 0.0.40
codegen_flags: <defaults>
</compile_context>

<pallas_src>
import jax
import jax.numpy as jnp
from jax.experimental import pallas as pl
from jax.experimental.pallas import tpu as pltpu


def _round_up(x: int, m: int) -> int:
    return ((x + m - 1) // m) * m


def _vmem_capacity_bytes() -> int:
    """Per-core VMEM capacity; conservative 64 MiB (v7x) fallback."""
    try:
        return int(pltpu.get_tpu_info().vmem_capacity_bytes)
    except Exception:
        return 64 << 20


def _continue_predictor_kernel(
    h_ref,      # (TB, Hp)  hidden block (f32 or bf16)
    s_ref,      # (TB, Sp)  state block  (f32 or bf16)
    w1h_ref,    # (Hp, Hp)  bf16  first-layer weight slice acting on `hidden`
    w1s_ref,    # (Sp, Hp)  bf16  first-layer weight slice acting on `state`
    b1_ref,     # (1, Hp)   f32
    w2_ref,     # (Hp, Hp)  bf16
    b2_ref,     # (1, Hp)   f32
    w3_ref,     # (Hp, 1)   f32   output-layer weight column (padded)
    b3_ref,     # (1, 1)    f32   SMEM scalar
    o_ref,      # (1, 1, TB) f32  lane-dense sigmoid output block
):
    # bf16 MXU operands (no-op cast if the producer already streams bf16),
    # f32 accumulation.
    h = h_ref[...].astype(jnp.bfloat16)
    s = s_ref[...].astype(jnp.bfloat16)

    # Dense layer 0: Linear(H+S -> H) with the concat folded into two dots, then SiLU.
    x = (
        jnp.dot(h, w1h_ref[...], preferred_element_type=jnp.float32)
        + jnp.dot(s, w1s_ref[...], preferred_element_type=jnp.float32)
        + b1_ref[...]
    )
    x = x * jax.nn.sigmoid(x)  # SiLU (f32, EUP)

    # Dense layer 1: Linear(H -> H) + SiLU.
    x = (
        jnp.dot(x.astype(jnp.bfloat16), w2_ref[...], preferred_element_type=jnp.float32)
        + b2_ref[...]
    )
    x = x * jax.nn.sigmoid(x)  # SiLU

    # Output layer: Linear(H -> 1) + Sigmoid, produced lane-dense.
    # Tile-aligned XLU transpose (TB, Hp) -> (Hp, TB), lane-broadcast multiply by
    # the f32 w3 column, sublane reduce -> (1, TB). Avoids a degenerate N=1 MXU
    # matmul and width-1 masked stores; XLU/VPU have plenty of slack here.
    x_t = jnp.transpose(x)                                        # (Hp, TB) f32
    y = jnp.sum(x_t * w3_ref[...], axis=0, keepdims=True) + b3_ref[0, 0]   # (1, TB)
    o_ref[0] = jax.nn.sigmoid(y).astype(o_ref.dtype)


def prepare_params(params, hidden_dim):
    """One-time weight preparation (hoisted out of the per-call hot path).

    Transposes PyTorch (out, in) weights to (in, out), splits W1 so the kernel
    avoids an in-kernel concat, zero-pads every feature dim up to a multiple of
    128 (numerically exact), and casts the MXU weights to bf16. The output
    weight is kept as an f32 column (Hp, 1).
    """
    H = hidden_dim
    w1 = jnp.asarray(params["w1"], jnp.float32)          # (H, H+S)
    S = w1.shape[1] - H
    Hp = _round_up(H, 128)
    Sp = _round_up(S, 128)

    w1_t = w1.T                                           # (H+S, H)
    w1h = jnp.zeros((Hp, Hp), jnp.float32).at[:H, :H].set(w1_t[:H])
    w1s = jnp.zeros((Sp, Hp), jnp.float32).at[:S, :H].set(w1_t[H:])
    b1 = jnp.zeros((1, Hp), jnp.float32).at[0, :H].set(
        jnp.asarray(params["b1"], jnp.float32))
    w2 = jnp.zeros((Hp, Hp), jnp.float32).at[:H, :H].set(
        jnp.asarray(params["w2"], jnp.float32).T)
    b2 = jnp.zeros((1, Hp), jnp.float32).at[0, :H].set(
        jnp.asarray(params["b2"], jnp.float32))
    w3 = jnp.zeros((Hp, 1), jnp.float32).at[:H, 0].set(
        jnp.asarray(params["w3"], jnp.float32).reshape(H))
    b3 = jnp.asarray(params["b3"], jnp.float32).reshape(1, 1)

    return {
        "w1h": w1h.astype(jnp.bfloat16),                  # (Hp, Hp)
        "w1s": w1s.astype(jnp.bfloat16),                  # (Sp, Hp)
        "b1": b1,                                         # (1, Hp)
        "w2": w2.astype(jnp.bfloat16),                    # (Hp, Hp)
        "b2": b2,                                         # (1, Hp)
        "w3": w3,                                         # (Hp, 1) f32
        "b3": b3,                                         # (1, 1)
    }


def continue_predictor_forward(hidden, state, prepared, *, batch_tile=2048):
    """ContinuePredictor forward in one batch-tiled Pallas kernel.

    hidden:   (B, hidden_dim) float32 or bfloat16
    state:    (B, state_dim)  float32 or bfloat16
    prepared: output of prepare_params()
    returns:  (B, 1) float32 in (0, 1)
    """
    B, H = hidden.shape
    S = state.shape[-1]
    Hp = prepared["w2"].shape[0]
    Sp = prepared["w1s"].shape[0]

    # Pad feature dims to a full 128-lane width (exact: zero columns / zero
    # weight rows contribute nothing). Ideally the upstream RSSM already emits
    # padded (and bf16) activations so these pads are free.
    if H != Hp:
        hidden = jnp.pad(hidden, ((0, 0), (0, Hp - H)))
    if S != Sp:
        state = jnp.pad(state, ((0, 0), (0, Sp - S)))

    in_bytes = jnp.dtype(hidden.dtype).itemsize

    # ---- generation-aware VMEM budget & batch-tile selection -----------------
    cap = _vmem_capacity_bytes()
    vmem_limit = int(cap * 0.8)        # ~51 MiB on v7x (64 MiB VMEM), ~102 MiB on v5e/v6e

    # Resident weights/biases are single-buffered (pl.Buffered(1)).
    weight_bytes = (2 * Hp * Hp + Sp * Hp) * 2      # w1h, w2, w1s (bf16)
    weight_bytes += Hp * 4                          # w3 column (f32)
    weight_bytes += 2 * Hp * 4 + 4                  # b1, b2 (+ b3 scalar in SMEM)

    # Per-batch-row VMEM: double-buffered activation/output blocks plus the
    # live f32 intermediates (x, x^T) and their bf16 casts inside the kernel.
    per_row = 2 * (Hp + Sp) * in_bytes              # hidden/state blocks (x2 buffers)
    per_row += 2 * 4                                # (1, TB) f32 output block (x2 buffers)
    per_row += 3 * Hp * 4 + 2 * Hp * 2              # f32 intermediates + bf16 casts

    tb_vmem_max = max(
        128, (max(vmem_limit - weight_bytes, 0) // max(per_row, 1)) // 128 * 128)

    tb = min(batch_tile, tb_vmem_max)
    tb = max(128, (tb // 128) * 128)                # multiple of 128 -> unmasked lane-dense stores
    tb = min(tb, _round_up(B, 128))                 # don't over-pad tiny batches
    if B > 128:
        # Keep >=2 grid steps so ("parallel",) can shard the batch across the
        # two TensorCores on v7x (neutral on v5e/v6e).
        tb = min(tb, _round_up(-(-B // 2), 128))

    Bp = _round_up(B, tb)
    if Bp != B:
        pad = Bp - B
        hidden = jnp.pad(hidden, ((0, pad), (0, 0)))
        state = jnp.pad(state, ((0, pad), (0, 0)))
    grid_n = Bp // tb

    streamed = lambda shape: pl.BlockSpec(shape, lambda i: (i, 0))
    resident = lambda shape: pl.BlockSpec(                      # VMEM-resident, single-buffered
        shape, lambda i: (0, 0), pipeline_mode=pl.Buffered(1))

    out = pl.pallas_call(
        _continue_predictor_kernel,
        # Lane-dense output: one (1, TB) row per grid step.
        out_shape=jax.ShapeDtypeStruct((grid_n, 1, tb), jnp.float32),
        grid=(grid_n,),
        in_specs=[
            streamed((tb, Hp)),                  # hidden
            streamed((tb, Sp)),                  # state
            resident((Hp, Hp)),                  # w1h (bf16)
            resident((Sp, Hp)),                  # w1s (bf16)
            resident((1, Hp)),                   # b1
            resident((Hp, Hp)),                  # w2  (bf16)
            resident((1, Hp)),                   # b2
            resident((Hp, 1)),                   # w3 column (f32)
            pl.BlockSpec(memory_space=pltpu.MemorySpace.SMEM),   # b3 scalar
        ],
        out_specs=pl.BlockSpec((1, 1, tb), lambda i: (i, 0, 0)),
        compiler_params=pltpu.CompilerParams(
            dimension_semantics=("parallel",),   # shard batch across TCs on v7x
            vmem_limit_bytes=vmem_limit,
        ),
    )(
        hidden, state,
        prepared["w1h"], prepared["w1s"], prepared["b1"],
        prepared["w2"], prepared["b2"], prepared["w3"], prepared["b3"],
    )
    return out.reshape(-1)[:B].reshape(B, 1)


def init_params(key, hidden_dim, state_dim):
    """Deterministic synthetic parameter init matching the module's shapes."""
    ks = jax.random.split(key, 6)
    in0 = hidden_dim + state_dim

    def u(k, shape, fan_in):
        lim = 1.0 / jnp.sqrt(fan_in)
        return jax.random.uniform(k, shape, jnp.float32, -lim, lim)

    return {
        "w1": u(ks[0], (hidden_dim, in0), in0),                 # Linear(H+S -> H)
        "b1": u(ks[1], (hidden_dim,), in0),
        "w2": u(ks[2], (hidden_dim, hidden_dim), hidden_dim),   # Linear(H -> H)
        "b2": u(ks[3], (hidden_dim,), hidden_dim),
        "w3": u(ks[4], (1, hidden_dim), hidden_dim),            # Linear(H -> 1)
        "b3": u(ks[5], (1,), hidden_dim),
    }


def reference_forward(hidden, state, params):
    """Pure-JAX f32 reference with identical semantics to the PyTorch module."""
    x = jnp.concatenate([hidden, state], axis=-1)
    x = x @ params["w1"].T + params["b1"]
    x = x * jax.nn.sigmoid(x)
    x = x @ params["w2"].T + params["b2"]
    x = x * jax.nn.sigmoid(x)
    x = x @ params["w3"].T + params["b3"]
    return jax.nn.sigmoid(x)


def reference_forward_bf16(hidden, state, params):
    """Pure-JAX reference mirroring the kernel's bf16-matmul / f32-accumulate math
    (layers 0-1 in bf16 with f32 accumulation; output layer fully f32)."""
    H = params["w2"].shape[0]
    w1_t = params["w1"].T
    w1h = w1_t[:H].astype(jnp.bfloat16)
    w1s = w1_t[H:].astype(jnp.bfloat16)
    x = (
        jnp.dot(hidden.astype(jnp.bfloat16), w1h, preferred_element_type=jnp.float32)
        + jnp.dot(state.astype(jnp.bfloat16), w1s, preferred_element_type=jnp.float32)
        + params["b1"][None, :]
    )
    x = x * jax.nn.sigmoid(x)
    x = (
        jnp.dot(x.astype(jnp.bfloat16), params["w2"].T.astype(jnp.bfloat16),
                preferred_element_type=jnp.float32)
        + params["b2"][None, :]
    )
    x = x * jax.nn.sigmoid(x)
    y = x @ params["w3"].T + params["b3"][None, :]    # f32 output layer
    return jax.nn.sigmoid(y)


if __name__ == "__main__":
    key = jax.random.PRNGKey(0)
    k_h, k_s, k_p = jax.random.split(key, 3)

    batch = 260         # >128 and not a multiple of 128: exercises padding + a 2-step grid
    hidden_dim = 32
    state_dim = 32

    hidden = jax.random.normal(k_h, (batch, hidden_dim), jnp.float32)
    state = jax.random.normal(k_s, (batch, state_dim), jnp.float32)
    params = init_params(k_p, hidden_dim, state_dim)

    prepared = prepare_params(params, hidden_dim)   # one-time weight prep (not in hot path)

    out = continue_predictor_forward(hidden, state, prepared)
    out = jax.block_until_ready(out)

    ref_f32 = reference_forward(hidden, state, params)
    ref_bf16 = reference_forward_bf16(hidden, state, params)

    assert out.shape == (batch, 1)
    assert bool(jnp.all(jnp.isfinite(out)))
    # Tight check against a reference mirroring the kernel's bf16/f32 mixed precision.
    assert jnp.allclose(out, ref_bf16, atol=1e-4, rtol=1e-4)
    # Loose check against the full-f32 PyTorch-equivalent reference (bf16 matmul rounding).
    assert jnp.allclose(out, ref_f32, atol=3e-2, rtol=3e-2)

    print("KERNEL_OK")
</pallas_src>

<mosaic_0001>
module attributes {stable_mosaic.version = 11 : i64} {
  func.func @_continue_predictor_kernel(%arg0: i32, %arg1: memref<256x128xf32, #tpu.memory_space<vmem>>, %arg2: memref<256x128xf32, #tpu.memory_space<vmem>>, %arg3: memref<128x128xbf16, #tpu.memory_space<vmem>>, %arg4: memref<128x128xbf16, #tpu.memory_space<vmem>>, %arg5: memref<1x128xf32, #tpu.memory_space<vmem>>, %arg6: memref<128x128xbf16, #tpu.memory_space<vmem>>, %arg7: memref<1x128xf32, #tpu.memory_space<vmem>>, %arg8: memref<128x1xf32, #tpu.memory_space<vmem>>, %arg9: memref<1x1xf32, #tpu.memory_space<smem>>, %arg10: memref<1x1x256xf32, #tpu.memory_space<vmem>>) attributes {dimension_semantics = [#tpu.dimension_semantics<parallel>], iteration_bounds = array<i64: 2>, scalar_prefetch = 0 : i64, scratch_operands = 0 : i64, tpu.core_type = #tpu.core_type<tc>, window_params = [{transform_indices = @transform_0, window_bounds = array<i64: 256, 128>}, {transform_indices = @transform_1, window_bounds = array<i64: 256, 128>}, {pipeline_mode = #tpu.pipeline_mode<synchronous>, transform_indices = @transform_2, window_bounds = array<i64: 128, 128>}, {pipeline_mode = #tpu.pipeline_mode<synchronous>, transform_indices = @transform_3, window_bounds = array<i64: 128, 128>}, {pipeline_mode = #tpu.pipeline_mode<synchronous>, transform_indices = @transform_4, window_bounds = array<i64: 1, 128>}, {pipeline_mode = #tpu.pipeline_mode<synchronous>, transform_indices = @transform_5, window_bounds = array<i64: 128, 128>}, {pipeline_mode = #tpu.pipeline_mode<synchronous>, transform_indices = @transform_6, window_bounds = array<i64: 1, 128>}, {pipeline_mode = #tpu.pipeline_mode<synchronous>, transform_indices = @transform_7, window_bounds = array<i64: 128, 1>}, {transform_indices = @transform_8, window_bounds = array<i64: 1, 1>}, {transform_indices = @transform_9, window_bounds = array<i64: 1, 1, 256>}]} {
    %c0 = arith.constant 0 : index
    %c0_0 = arith.constant 0 : index
    %0 = vector.load %arg1[%c0, %c0_0] : memref<256x128xf32, #tpu.memory_space<vmem>>, vector<256x128xf32>
    %1 = arith.truncf %0 : vector<256x128xf32> to vector<256x128xbf16>
    %c0_1 = arith.constant 0 : index
    %c0_2 = arith.constant 0 : index
    %2 = vector.load %arg2[%c0_1, %c0_2] : memref<256x128xf32, #tpu.memory_space<vmem>>, vector<256x128xf32>
    %3 = arith.truncf %2 : vector<256x128xf32> to vector<256x128xbf16>
    %c0_3 = arith.constant 0 : index
    %c0_4 = arith.constant 0 : index
    %4 = vector.load %arg3[%c0_3, %c0_4] : memref<128x128xbf16, #tpu.memory_space<vmem>>, vector<128x128xbf16>
    %cst = arith.constant dense<0.000000e+00> : vector<256x128xf32>
    %5 = tpu.matmul %1, %4, %cst {dimension_numbers = #tpu.dot_dimension_numbers<[1], [0], [0], [1], [0, 0, 1, 1], [], []>} : vector<256x128xbf16>, vector<128x128xbf16>, vector<256x128xf32> -> vector<256x128xf32>
    %c0_5 = arith.constant 0 : index
    %c0_6 = arith.constant 0 : index
    %6 = vector.load %arg4[%c0_5, %c0_6] : memref<128x128xbf16, #tpu.memory_space<vmem>>, vector<128x128xbf16>
    %cst_7 = arith.constant dense<0.000000e+00> : vector<256x128xf32>
    %7 = tpu.matmul %3, %6, %cst_7 {dimension_numbers = #tpu.dot_dimension_numbers<[1], [0], [0], [1], [0, 0, 1, 1], [], []>} : vector<256x128xbf16>, vector<128x128xbf16>, vector<256x128xf32> -> vector<256x128xf32>
    %8 = arith.addf %5, %7 : vector<256x128xf32>
    %c0_8 = arith.constant 0 : index
    %c0_9 = arith.constant 0 : index
    %9 = vector.load %arg5[%c0_8, %c0_9] : memref<1x128xf32, #tpu.memory_space<vmem>>, vector<1x128xf32>
    %10 = vector.broadcast %9 : vector<1x128xf32> to vector<256x128xf32>
    %11 = arith.addf %8, %10 : vector<256x128xf32>
    %12 = arith.negf %11 : vector<256x128xf32>
    %13 = math.exp %12 : vector<256x128xf32>
    %cst_10 = arith.constant 1.000000e+00 : f32
    %14 = vector.broadcast %cst_10 : f32 to vector<256x128xf32>
    %15 = arith.addf %14, %13 : vector<256x128xf32>
    %16 = arith.divf %14, %15 : vector<256x128xf32>
    %17 = arith.mulf %11, %16 : vector<256x128xf32>
    %18 = arith.truncf %17 : vector<256x128xf32> to vector<256x128xbf16>
    %c0_11 = arith.constant 0 : index
    %c0_12 = arith.constant 0 : index
    %19 = vector.load %arg6[%c0_11, %c0_12] : memref<128x128xbf16, #tpu.memory_space<vmem>>, vector<128x128xbf16>
    %cst_13 = arith.constant dense<0.000000e+00> : vector<256x128xf32>
    %20 = tpu.matmul %18, %19, %cst_13 {dimension_numbers = #tpu.dot_dimension_numbers<[1], [0], [0], [1], [0, 0, 1, 1], [], []>} : vector<256x128xbf16>, vector<128x128xbf16>, vector<256x128xf32> -> vector<256x128xf32>
    %c0_14 = arith.constant 0 : index
    %c0_15 = arith.constant 0 : index
    %21 = vector.load %arg7[%c0_14, %c0_15] : memref<1x128xf32, #tpu.memory_space<vmem>>, vector<1x128xf32>
    %22 = vector.broadcast %21 : vector<1x128xf32> to vector<256x128xf32>
    %23 = arith.addf %20, %22 : vector<256x128xf32>
    %24 = arith.negf %23 : vector<256x128xf32>
    %25 = math.exp %24 : vector<256x128xf32>
    %cst_16 = arith.constant 1.000000e+00 : f32
    %26 = vector.broadcast %cst_16 : f32 to vector<256x128xf32>
    %27 = arith.addf %26, %25 : vector<256x128xf32>
    %28 = arith.divf %26, %27 : vector<256x128xf32>
    %29 = arith.mulf %23, %28 : vector<256x128xf32>
    %30 = tpu.transpose %29, [1, 0] : vector<256x128xf32> -> vector<128x256xf32>
    %c0_17 = arith.constant 0 : index
    %c0_18 = arith.constant 0 : index
    %31 = vector.load %arg8[%c0_17, %c0_18] : memref<128x1xf32, #tpu.memory_space<vmem>>, vector<128x1xf32>
    %32 = vector.broadcast %31 : vector<128x1xf32> to vector<128x256xf32>
    %33 = arith.mulf %30, %32 : vector<128x256xf32>
    %cst_19 = arith.constant dense<0.000000e+00> : vector<256xf32>
    %34 = vector.multi_reduction <add>, %33, %cst_19 [0] : vector<128x256xf32> to vector<256xf32>
    %35 = vector.shape_cast %34 : vector<256xf32> to vector<1x256xf32>
    %c0_20 = arith.constant 0 : index
    %c0_21 = arith.constant 0 : index
    %36 = memref.load %arg9[%c0_20, %c0_21] : memref<1x1xf32, #tpu.memory_space<smem>>
    %37 = vector.broadcast %36 : f32 to vector<1x256xf32>
    %38 = arith.addf %35, %37 : vector<1x256xf32>
    %39 = arith.negf %38 : vector<1x256xf32>
    %40 = math.exp %39 : vector<1x256xf32>
    %cst_22 = arith.constant 1.000000e+00 : f32
    %41 = vector.broadcast %cst_22 : f32 to vector<1x256xf32>
    %42 = arith.addf %41, %40 : vector<1x256xf32>
    %43 = arith.divf %41, %42 : vector<1x256xf32>
    %c0_23 = arith.constant 0 : index
    %c0_24 = arith.constant 0 : index
    %c0_25 = arith.constant 0 : index
    %44 = vector.load %arg10[%c0_23, %c0_24, %c0_25] : memref<1x1x256xf32, #tpu.memory_space<vmem>>, vector<1x1x256xf32>
    %45 = vector.shape_cast %44 : vector<1x1x256xf32> to vector<1x256xf32>
    %46 = vector.shape_cast %43 : vector<1x256xf32> to vector<1x1x256xf32>
    tpu.vector_store %arg10[%c0_23, %c0_24, %c0_25], %46 {strides = array<i32>} : memref<1x1x256xf32, #tpu.memory_space<vmem>>, vector<1x1x256xf32>,
    return
  }
  func.func @transform_0(%arg0: i32) -> (i32, i32) {
    %c0_i32 = arith.constant 0 : i32
    %c0_i32_0 = arith.constant 0 : i32
    return %arg0, %c0_i32 : i32, i32
  }
  func.func @transform_1(%arg0: i32) -> (i32, i32) {
    %c0_i32 = arith.constant 0 : i32
    %c0_i32_0 = arith.constant 0 : i32
    return %arg0, %c0_i32 : i32, i32
  }
  func.func @transform_2(%arg0: i32) -> (i32, i32) {
    %c0_i32 = arith.constant 0 : i32
    %c0_i32_0 = arith.constant 0 : i32
    %c0_i32_1 = arith.constant 0 : i32
    return %c0_i32, %c0_i32_0 : i32, i32
  }
  func.func @transform_3(%arg0: i32) -> (i32, i32) {
    %c0_i32 = arith.constant 0 : i32
    %c0_i32_0 = arith.constant 0 : i32
    %c0_i32_1 = arith.constant 0 : i32
    return %c0_i32, %c0_i32_0 : i32, i32
  }
  func.func @transform_4(%arg0: i32) -> (i32, i32) {
    %c0_i32 = arith.constant 0 : i32
    %c0_i32_0 = arith.constant 0 : i32
    %c0_i32_1 = arith.constant 0 : i32
    return %c0_i32, %c0_i32_0 : i32, i32
  }
  func.func @transform_5(%arg0: i32) -> (i32, i32) {
    %c0_i32 = arith.constant 0 : i32
    %c0_i32_0 = arith.constant 0 : i32
    %c0_i32_1 = arith.constant 0 : i32
    return %c0_i32, %c0_i32_0 : i32, i32
  }
  func.func @transform_6(%arg0: i32) -> (i32, i32) {
    %c0_i32 = arith.constant 0 : i32
    %c0_i32_0 = arith.constant 0 : i32
    %c0_i32_1 = arith.constant 0 : i32
    return %c0_i32, %c0_i32_0 : i32, i32
  }
  func.func @transform_7(%arg0: i32) -> (i32, i32) {
    %c0_i32 = arith.constant 0 : i32
    %c0_i32_0 = arith.constant 0 : i32
    %c0_i32_1 = arith.constant 0 : i32
    return %c0_i32, %c0_i32_0 : i32, i32
  }
  func.func @transform_8(%arg0: i32) -> (i32, i32) {
    %c0_i32 = arith.constant 0 : i32
    %c0_i32_0 = arith.constant 0 : i32
    %c0_i32_1 = arith.constant 0 : i32
    return %c0_i32, %c0_i32_0 : i32, i32
  }
  func.func @transform_9(%arg0: i32) -> (i32, i32, i32) {
    %c0_i32 = arith.constant 0 : i32
    %c0_i32_0 = arith.constant 0 : i32
    %c0_i32_1 = arith.constant 0 : i32
    return %arg0, %c0_i32, %c0_i32_0 : i32, i32, i32
  }
}

</mosaic_0001>

<llo_original>
// kernel: tpu_custom_call.1
$region0: #{tpu_custom_call.1}
  #allocation0 [shape = 'u32[]', space=smem, size = 0x4, offset = 0x4, fixed_abs, tag = 'smem constant byte address 0x4 - core index']
  #allocation1 [shape = 'u32[144,128]{1,0:T(1,128)}', space=vmem, size = 0x12000, scoped, tag = 'internal scratch']
  #allocation2 [shape = 'f32[1,1]{1,0:T(1,128)S(6)}', space=smem, size = 0x200, scoped, tag = 'scoped memory for tpu_custom_call.1']
  %s0 = inlined_call_operand.hbm [shape: f32[512,128], index: 0, kind: input, shape index: {}]
  %s1 = inlined_call_operand.hbm [shape: f32[512,128], index: 1, kind: input, shape index: {}]
  %s2 = inlined_call_operand.vmem [shape: bf16[128,128], index: 2, kind: input, shape index: {}]
  %s3 = inlined_call_operand.vmem [shape: bf16[128,128], index: 3, kind: input, shape index: {}]
  %s4 = inlined_call_operand.vmem [shape: f32[1,128], index: 4, kind: input, shape index: {}]
  %s5 = inlined_call_operand.hbm [shape: bf16[128,128], index: 5, kind: input, shape index: {}]
  %s6 = inlined_call_operand.vmem [shape: f32[1,128], index: 6, kind: input, shape index: {}]
  %s7 = inlined_call_operand.vmem [shape: f32[128,1], index: 7, kind: input, shape index: {}]
  %s8 = inlined_call_operand.<no memory space> [shape: f32[1,1], index: 8, kind: input, shape index: {}]
  %s9 = inlined_call_operand.hbm [shape: f32[2,1,256], index: 9, kind: output, shape index: {}]
  %s10 = sld [smem:[#allocation0]]
  $region81: #{tpu_custom_call.1} parent=0
    _
  %s12 = ssub.s32 1, %s10
  %s13 = scalar_select 0, %s12, %s10
  %14 = sst [smem:[#allocation2]] %s8
  $region1: #{tpu_custom_call.1} parent=0
    #allocation3 [shape = 'u8[262144]{0}', space=vmem, size = 0x40000, scoped, tag = 'input window, operand 0']
    #allocation4 [shape = 's32[2]{0}', space=sflag, size = 0x8, scoped, tag = 'scoped memory for tpu_custom_call.1']
    #allocation5 [shape = 's32[2]{0}', space=sflag, size = 0x8, scoped, tag = 'scoped memory for tpu_custom_call.1']
    #allocation6 [shape = 'u8[262144]{0}', space=vmem, size = 0x40000, scoped, tag = 'input window, operand 1']
    #allocation7 [shape = 's32[2]{0}', space=sflag, size = 0x8, scoped, tag = 'scoped memory for tpu_custom_call.1']
    #allocation8 [shape = 'u8[32768]{0}', space=vmem, size = 0x8000, scoped, tag = 'input window, operand 5, single buffered']
    #allocation9 [shape = 'u8[2048]{0}', space=vmem, size = 0x800, scoped, tag = 'output window, operand 0']
    %15 = vsyncpa [#allocation4], 0
    %s16 = scalar_lea.sflag [#allocation4], 1
    %17 = vsyncpa %s16, 0
    %18 = vsyncpa [#allocation7], 0
    %s19 = scalar_lea.sflag [#allocation7], 1
    %20 = vsyncpa %s19, 0
    %21 = vsyncpa [#allocation5], 0
    %s22 = scalar_lea.sflag [#allocation5], 1
    %23 = vsyncpa %s22, 0
    loop: start=0, step=1, limit=4
    $region2: #{tpu_custom_call.1} parent=1 // loop_pre_header
      _
    $region3: #{tpu_custom_call.1} parent=1 // loop_header
      %s25 = sphi 0, %s29
      %p26 = scmp.ge.s32.totalorder %s25, 4
      %s35 = sphi 0, %s37
      %s38 = sphi 0, %s35
      %s39 = sphi 0, %s38
      %s55 = sphi 0, %s39
      %s61 = sphi 0, %s63
      %s64 = sphi 0, %s61
      %s65 = sphi 0, %s64
      %s81 = sphi 0, %s65
      %s85 = sphi 0, %s85
      %s87 = sphi 0, %s85
      %s88 = sphi 0, %s87
      %s102 = sphi 0, %s88
      %s106 = sphi 0, %s106
      %s108 = sphi 0, %s106
      %s109 = sphi 0, %s108
      %s123 = sphi 0, %s109
      %s127 = sphi 0, %s127
      %s129 = sphi 0, %s127
      %s130 = sphi 0, %s129
      %s144 = sphi 0, %s130
      %s148 = sphi 0, %s148
      %s150 = sphi 0, %s148
      %s151 = sphi 0, %s150
      %s165 = sphi 0, %s151
      %s169 = sphi 0, %s169
      %s171 = sphi 0, %s169
      %s172 = sphi 0, %s171
      %s186 = sphi 0, %s172
      %s190 = sphi 0, %s190
      %s192 = sphi 0, %s190
      %s193 = sphi 0, %s192
      %s207 = sphi 0, %s193
      %s211 = sphi 0, %s211
      %s213 = sphi 0, %s211
      %s214 = sphi 0, %s213
      %s228 = sphi 0, %s214
      %s234 = sphi 0, %s236
      %s237 = sphi 0, %s234
      %s238 = sphi 0, %s237
      %s254 = sphi 0, %s238
    $region4: #{tpu_custom_call.1} parent=1 // loop_header_branch
      %28 = sbr.rel (%p26) target = $region8
    $region5: #{tpu_custom_call.1} parent=1 // loop_body
      %s30 = ssub.s32 %s25, 1
      %s31 = ssub.s32 %s25, 2
      %s32 = sadd.s32 %s25, 1
      %s33 = ssub.s32 %s25, %s32
      %p34 = scmp.eq.s32.totalorder %s33, 0
      %s36 = sadd.s32 %s35, 1
      %s37 = scalar_select %p34, %s35, %s36
      %p40 = pneg %p34
      %p41 = scmp.eq.s32.totalorder %s25, 1
      %p42 = por %p40, %p41
      %p43 = scmp.ne.s32.totalorder %s35, %s38
      %p44 = scmp.eq.s32.totalorder %s25, 0
      %p45 = por %p43, %p44
      %p46 = scmp.ne.s32.totalorder %s35, %s38
      %p47 = scmp.eq.s32.totalorder %s30, 1
      %p48 = por %p46, %p47
      %p49 = scmp.ne.s32.totalorder %s38, %s39
      %p50 = scmp.eq.s32.totalorder %s30, 0
      %p51 = por %p49, %p50
      %p52 = scmp.ne.s32.totalorder %s38, %s39
      %p53 = scmp.eq.s32.totalorder %s31, 1
      %p54 = por %p52, %p53
      %p56 = scmp.ne.s32.totalorder %s39, %s55
      %p57 = scmp.eq.s32.totalorder %s31, 0
      %p58 = por %p56, %p57
      %s59 = ssub.s32 %s25, %s32
      %p60 = scmp.eq.s32.totalorder %s59, 0
      %s62 = sadd.s32 %s61, 1
      %s63 = scalar_select %p60, %s61, %s62
      %p66 = pneg %p60
      %p67 = scmp.eq.s32.totalorder %s25, 1
      %p68 = por %p66, %p67
      %p69 = scmp.ne.s32.totalorder %s61, %s64
      %p70 = scmp.eq.s32.totalorder %s25, 0
      %p71 = por %p69, %p70
      %p72 = scmp.ne.s32.totalorder %s61, %s64
      %p73 = scmp.eq.s32.totalorder %s30, 1
      %p74 = por %p72, %p73
      %p75 = scmp.ne.s32.totalorder %s64, %s65
      %p76 = scmp.eq.s32.totalorder %s30, 0
      %p77 = por %p75, %p76
      %p78 = scmp.ne.s32.totalorder %s64, %s65
      %p79 = scmp.eq.s32.totalorder %s31, 1
      %p80 = por %p78, %p79
      %p82 = scmp.ne.s32.totalorder %s65, %s81
      %p83 = scmp.eq.s32.totalorder %s31, 0
      %p84 = por %p82, %p83
      %s86 = sadd.s32 %s85, 1
      %p89 = scmp.eq.s32.totalorder %s25, 1
      %p90 = scmp.ne.s32.totalorder %s85, %s87
      %p91 = scmp.eq.s32.totalorder %s25, 0
      %p92 = por %p90, %p91
      %p93 = scmp.ne.s32.totalorder %s85, %s87
      %p94 = scmp.eq.s32.totalorder %s30, 1
      %p95 = por %p93, %p94
      %p96 = scmp.ne.s32.totalorder %s87, %s88
      %p97 = scmp.eq.s32.totalorder %s30, 0
      %p98 = por %p96, %p97
      %p99 = scmp.ne.s32.totalorder %s87, %s88
      %p100 = scmp.eq.s32.totalorder %s31, 1
      %p101 = por %p99, %p100
      %p103 = scmp.ne.s32.totalorder %s88, %s102
      %p104 = scmp.eq.s32.totalorder %s31, 0
      %p105 = por %p103, %p104
      %s107 = sadd.s32 %s106, 1
      %p110 = scmp.eq.s32.totalorder %s25, 1
      %p111 = scmp.ne.s32.totalorder %s106, %s108
      %p112 = scmp.eq.s32.totalorder %s25, 0
      %p113 = por %p111, %p112
      %p114 = scmp.ne.s32.totalorder %s106, %s108
      %p115 = scmp.eq.s32.totalorder %s30, 1
      %p116 = por %p114, %p115
      %p117 = scmp.ne.s32.totalorder %s108, %s109
      %p118 = scmp.eq.s32.totalorder %s30, 0
      %p119 = por %p117, %p118
      %p120 = scmp.ne.s32.totalorder %s108, %s109
      %p121 = scmp.eq.s32.totalorder %s31, 1
      %p122 = por %p120, %p121
      %p124 = scmp.ne.s32.totalorder %s109, %s123
      %p125 = scmp.eq.s32.totalorder %s31, 0
      %p126 = por %p124, %p125
      %s128 = sadd.s32 %s127, 1
      %p131 = scmp.eq.s32.totalorder %s25, 1
      %p132 = scmp.ne.s32.totalorder %s127, %s129
      %p133 = scmp.eq.s32.totalorder %s25, 0
      %p134 = por %p132, %p133
      %p135 = scmp.ne.s32.totalorder %s127, %s129
      %p136 = scmp.eq.s32.totalorder %s30, 1
      %p137 = por %p135, %p136
      %p138 = scmp.ne.s32.totalorder %s129, %s130
      %p139 = scmp.eq.s32.totalorder %s30, 0
      %p140 = por %p138, %p139
      %p141 = scmp.ne.s32.totalorder %s129, %s130
      %p142 = scmp.eq.s32.totalorder %s31, 1
      %p143 = por %p141, %p142
      %p145 = scmp.ne.s32.totalorder %s130, %s144
      %p146 = scmp.eq.s32.totalorder %s31, 0
      %p147 = por %p145, %p146
      %s149 = sadd.s32 %s148, 1
      %p152 = scmp.eq.s32.totalorder %s25, 1
      %p153 = scmp.ne.s32.totalorder %s148, %s150
      %p154 = scmp.eq.s32.totalorder %s25, 0
      %p155 = por %p153, %p154
      %p156 = scmp.ne.s32.totalorder %s148, %s150
      %p157 = scmp.eq.s32.totalorder %s30, 1
      %p158 = por %p156, %p157
      %p159 = scmp.ne.s32.totalorder %s150, %s151
      %p160 = scmp.eq.s32.totalorder %s30, 0
      %p161 = por %p159, %p160
      %p162 = scmp.ne.s32.totalorder %s150, %s151
      %p163 = scmp.eq.s32.totalorder %s31, 1
      %p164 = por %p162, %p163
      %p166 = scmp.ne.s32.totalorder %s151, %s165
      %p167 = scmp.eq.s32.totalorder %s31, 0
      %p168 = por %p166, %p167
      %s170 = sadd.s32 %s169, 1
      %p173 = scmp.eq.s32.totalorder %s25, 1
      %p174 = scmp.ne.s32.totalorder %s169, %s171
      %p175 = scmp.eq.s32.totalorder %s25, 0
      %p176 = por %p174, %p175
      %p177 = scmp.ne.s32.totalorder %s169, %s171
      %p178 = scmp.eq.s32.totalorder %s30, 1
      %p179 = por %p177, %p178
      %p180 = scmp.ne.s32.totalorder %s171, %s172
      %p181 = scmp.eq.s32.totalorder %s30, 0
      %p182 = por %p180, %p181
      %p183 = scmp.ne.s32.totalorder %s171, %s172
      %p184 = scmp.eq.s32.totalorder %s31, 1
      %p185 = por %p183, %p184
      %p187 = scmp.ne.s32.totalorder %s172, %s186
      %p188 = scmp.eq.s32.totalorder %s31, 0
      %p189 = por %p187, %p188
      %s191 = sadd.s32 %s190, 1
      %p194 = scmp.eq.s32.totalorder %s25, 1
      %p195 = scmp.ne.s32.totalorder %s190, %s192
      %p196 = scmp.eq.s32.totalorder %s25, 0
      %p197 = por %p195, %p196
      %p198 = scmp.ne.s32.totalorder %s190, %s192
      %p199 = scmp.eq.s32.totalorder %s30, 1
      %p200 = por %p198, %p199
      %p201 = scmp.ne.s32.totalorder %s192, %s193
      %p202 = scmp.eq.s32.totalorder %s30, 0
      %p203 = por %p201, %p202
      %p204 = scmp.ne.s32.totalorder %s192, %s193
      %p205 = scmp.eq.s32.totalorder %s31, 1
      %p206 = por %p204, %p205
      %p208 = scmp.ne.s32.totalorder %s193, %s207
      %p209 = scmp.eq.s32.totalorder %s31, 0
      %p210 = por %p208, %p209
      %s212 = sadd.s32 %s211, 1
      %p215 = scmp.eq.s32.totalorder %s25, 1
      %p216 = scmp.ne.s32.totalorder %s211, %s213
      %p217 = scmp.eq.s32.totalorder %s25, 0
      %p218 = por %p216, %p217
      %p219 = scmp.ne.s32.totalorder %s211, %s213
      %p220 = scmp.eq.s32.totalorder %s30, 1
      %p221 = por %p219, %p220
      %p222 = scmp.ne.s32.totalorder %s213, %s214
      %p223 = scmp.eq.s32.totalorder %s30, 0
      %p224 = por %p222, %p223
      %p225 = scmp.ne.s32.totalorder %s213, %s214
      %p226 = scmp.eq.s32.totalorder %s31, 1
      %p227 = por %p225, %p226
      %p229 = scmp.ne.s32.totalorder %s214, %s228
      %p230 = scmp.eq.s32.totalorder %s31, 0
      %p231 = por %p229, %p230
      %s232 = ssub.s32 %s25, %s32
      %p233 = scmp.eq.s32.totalorder %s232, 0
      %s235 = sadd.s32 %s234, 1
      %s236 = scalar_select %p233, %s234, %s235
      %p239 = pneg %p233
      %p240 = scmp.eq.s32.totalorder %s25, 1
      %p241 = por %p239, %p240
      %p242 = scmp.ne.s32.totalorder %s234, %s237
      %p243 = scmp.eq.s32.totalorder %s25, 0
      %p244 = por %p242, %p243
      %p245 = scmp.ne.s32.totalorder %s234, %s237
      %p246 = scmp.eq.s32.totalorder %s30, 1
      %p247 = por %p245, %p246
      %p248 = scmp.ne.s32.totalorder %s237, %s238
      %p249 = scmp.eq.s32.totalorder %s30, 0
      %p250 = por %p248, %p249
      %p251 = scmp.ne.s32.totalorder %s237, %s238
      %p252 = scmp.eq.s32.totalorder %s31, 1
      %p253 = por %p251, %p252
      %p255 = scmp.ne.s32.totalorder %s238, %s254
      %p256 = scmp.eq.s32.totalorder %s31, 0
      %p257 = por %p255, %p256
      %p258 = scmp.le.s32.totalorder 1, %s25
      %p259 = scmp.lt.s32.totalorder %s25, 3
      %p260 = pnand %p258, %p259
      %p261 = pneg %p260
      // Predicated region
      $region9: #{tpu_custom_call.1} parent=5 // pred_check
        _
      $region10: #{tpu_custom_call.1} parent=5 // pred_check_branch
        %263 = sbr.rel (%p260) target = $region12
      $region11: #{tpu_custom_call.1} parent=5 // pred_region
        %s264 = ssub.s32 %s25, 1
        // Predicated region
        $region13: #{tpu_custom_call.1} parent=11 // pred_check
          %p265 = pneg %p98
        $region14: #{tpu_custom_call.1} parent=11 // pred_check_branch
          %267 = sbr.rel (%p265) target = $region16
        $region15: #{tpu_custom_call.1} parent=11 // pred_region
          _
        $region16: #{tpu_custom_call.1} parent=11 // pred_fallthru
          _
        // Predicated region
        $region17: #{tpu_custom_call.1} parent=11 // pred_check
          %p268 = pneg %p119
        $region18: #{tpu_custom_call.1} parent=11 // pred_check_branch
          %270 = sbr.rel (%p268) target = $region20
        $region19: #{tpu_custom_call.1} parent=11 // pred_region
          _
        $region20: #{tpu_custom_call.1} parent=11 // pred_fallthru
          _
        // Predicated region
        $region21: #{tpu_custom_call.1} parent=11 // pred_check
          %p271 = pneg %p140
        $region22: #{tpu_custom_call.1} parent=11 // pred_check_branch
          %273 = sbr.rel (%p271) target = $region24
        $region23: #{tpu_custom_call.1} parent=11 // pred_region
          _
        $region24: #{tpu_custom_call.1} parent=11 // pred_fallthru
          _
        // Predicated region
        $region25: #{tpu_custom_call.1} parent=11 // pred_check
          %p274 = pneg %p161
        $region26: #{tpu_custom_call.1} parent=11 // pred_check_branch
          %276 = sbr.rel (%p274) target = $region28
        $region27: #{tpu_custom_call.1} parent=11 // pred_region
          %s278 = ssub.s32 1024, 1024
          %279 = vsyncadd [#allocation7], %s278
          %s280 = sshll.u32 [#allocation8], 4
          %s281 = int_to_ptr.vmem [resolvable:$true] %s280
          %286 = dma.hbm_to_vmem [thread:$0]  %s5, 1024, %s281, [#allocation7], 64, 64, 4
        $region28: #{tpu_custom_call.1} parent=11 // pred_fallthru
          _
        // Predicated region
        $region29: #{tpu_custom_call.1} parent=11 // pred_check
          %p287 = pneg %p182
        $region30: #{tpu_custom_call.1} parent=11 // pred_check_branch
          %289 = sbr.rel (%p287) target = $region32
        $region31: #{tpu_custom_call.1} parent=11 // pred_region
          _
        $region32: #{tpu_custom_call.1} parent=11 // pred_fallthru
          _
        // Predicated region
        $region33: #{tpu_custom_call.1} parent=11 // pred_check
          %p290 = pneg %p203
        $region34: #{tpu_custom_call.1} parent=11 // pred_check_branch
          %292 = sbr.rel (%p290) target = $region36
        $region35: #{tpu_custom_call.1} parent=11 // pred_region
          _
        $region36: #{tpu_custom_call.1} parent=11 // pred_fallthru
          _
        // Predicated region
        $region37: #{tpu_custom_call.1} parent=11 // pred_check
          %p293 = pneg %p224
        $region38: #{tpu_custom_call.1} parent=11 // pred_check_branch
          %295 = sbr.rel (%p293) target = $region40
        $region39: #{tpu_custom_call.1} parent=11 // pred_region
          _
        $region40: #{tpu_custom_call.1} parent=11 // pred_fallthru
          _
      $region12: #{tpu_custom_call.1} parent=5 // pred_fallthru
        _
      %p296 = scmp.lt.s32.totalorder %s25, 2
      // Predicated region
      $region41: #{tpu_custom_call.1} parent=5 // pred_check
        %p297 = pneg %p296
      $region42: #{tpu_custom_call.1} parent=5 // pred_check_branch
        %299 = sbr.rel (%p297) target = $region44
      $region43: #{tpu_custom_call.1} parent=5 // pred_region
        // Predicated region
        $region45: #{tpu_custom_call.1} parent=43 // pred_check
          %p300 = pneg %p45
        $region46: #{tpu_custom_call.1} parent=43 // pred_check_branch
          %302 = sbr.rel (%p300) target = $region48
        $region47: #{tpu_custom_call.1} parent=43 // pred_region
          %s303 = sand.u32 %s35, 1
          %s304 = scalar_lea.sflag [#allocation4], %s303
          %s305 = sand.u32 %s35, 1
          %s306 = smul.addr %s305, 256
          %s307 = scalar_lea.vmem [#allocation3], %s306
          %s308 = smul.u32 32, %s25
          %s310 = ssub.s32 4096, 4096
          %311 = vsyncadd %s304, %s310
          %s312 = smul.addr %s308, 128
          %s313 = scalar_lea.hbm %s0, %s312
          %s314 = sshll.u32 %s307, 4
          %s315 = int_to_ptr.vmem [resolvable:$true] %s314
          %320 = dma.hbm_to_vmem [thread:$0]  %s313, 4096, %s315, %s304, 128, 128, 8
        $region48: #{tpu_custom_call.1} parent=43 // pred_fallthru
          _
        // Predicated region
        $region49: #{tpu_custom_call.1} parent=43 // pred_check
          %p321 = pneg %p71
        $region50: #{tpu_custom_call.1} parent=43 // pred_check_branch
          %323 = sbr.rel (%p321) target = $region52
        $region51: #{tpu_custom_call.1} parent=43 // pred_region
          %s324 = sand.u32 %s25, 1
          %s325 = scalar_lea.sflag [#allocation7], %s324
          %s326 = sand.u32 %s61, 1
          %s327 = smul.addr %s326, 256
          %s328 = scalar_lea.vmem [#allocation6], %s327
          %s329 = smul.u32 32, %s25
          %s331 = ssub.s32 4096, 4096
          %332 = vsyncadd %s325, %s331
          %s333 = smul.addr %s329, 128
          %s334 = scalar_lea.hbm %s1, %s333
          %s335 = sshll.u32 %s328, 4
          %s336 = int_to_ptr.vmem [resolvable:$true] %s335
          %341 = dma.hbm_to_vmem [thread:$0]  %s334, 4096, %s336, %s325, 128, 128, 8
        $region52: #{tpu_custom_call.1} parent=43 // pred_fallthru
          _
      $region44: #{tpu_custom_call.1} parent=5 // pred_fallthru
        _
      %p342 = scmp.le.s32.totalorder 1, %s25
      %p343 = scmp.lt.s32.totalorder %s25, 3
      %p344 = pnand %p342, %p343
      %p345 = pneg %p344
      // Predicated region
      $region53: #{tpu_custom_call.1} parent=5 // pred_check
        _
      $region54: #{tpu_custom_call.1} parent=5 // pred_check_branch
        %347 = sbr.rel (%p344) target = $region56
      $region55: #{tpu_custom_call.1} parent=5 // pred_region
        %s348 = ssub.s32 %s25, 1
        %s349 = sand.u32 %s38, 1
        %s350 = scalar_lea.sflag [#allocation4], %s349
        %s351 = sand.u32 %s38, 1
        %s352 = smul.addr %s351, 256
        %s353 = scalar_lea.vmem [#allocation3], %s352
        // Predicated region
        $region57: #{tpu_custom_call.1} parent=55 // pred_check
          %p354 = pneg %p51
        $region58: #{tpu_custom_call.1} parent=55 // pred_check_branch
          %356 = sbr.rel (%p354) target = $region60
        $region59: #{tpu_custom_call.1} parent=55 // pred_region
          %357 = dma.done %s350, 4096
        $region60: #{tpu_custom_call.1} parent=55 // pred_fallthru
          _
        %s358 = sand.u32 %s30, 1
        %s359 = scalar_lea.sflag [#allocation7], %s358
        %s360 = sand.u32 %s64, 1
        %s361 = smul.addr %s360, 256
        %s362 = scalar_lea.vmem [#allocation6], %s361
        // Predicated region
        $region61: #{tpu_custom_call.1} parent=55 // pred_check
          %p363 = pneg %p77
        $region62: #{tpu_custom_call.1} parent=55 // pred_check_branch
          %365 = sbr.rel (%p363) target = $region64
        $region63: #{tpu_custom_call.1} parent=55 // pred_region
          %366 = dma.done %s359, 4096
        $region64: #{tpu_custom_call.1} parent=55 // pred_fallthru
          _
        // Predicated region
        $region65: #{tpu_custom_call.1} parent=55 // pred_check
          %p367 = pneg %p161
        $region66: #{tpu_custom_call.1} parent=55 // pred_check_branch
          %369 = sbr.rel (%p367) target = $region68
        $region67: #{tpu_custom_call.1} parent=55 // pred_region
          %370 = dma.done [#allocation7], 1024
        $region68: #{tpu_custom_call.1} parent=55 // pred_fallthru
          _
        %s371 = sand.u32 %s38, 1
        %s372 = scalar_lea.sflag [#allocation4], %s371
        %s373 = sand.u32 %s38, 1
        %s374 = smul.addr %s373, 256
        %s375 = scalar_lea.vmem [#allocation3], %s374
        %p376 = pneg %p51
        %p377 = pneg %p48
        %s378 = sand.u32 %s30, 1
        %s379 = scalar_lea.sflag [#allocation7], %s378
        %s380 = sand.u32 %s64, 1
        %s381 = smul.addr %s380, 256
        %s382 = scalar_lea.vmem [#allocation6], %s381
        %p383 = pneg %p77
        %p384 = pneg %p74
        %p385 = pneg %p98
        %p386 = pneg %p95
        %p387 = pneg %p119
        %p388 = pneg %p116
        %p389 = pneg %p140
        %p390 = pneg %p137
        %p391 = pneg %p161
        %p392 = pneg %p158
        %p393 = pneg %p182
        %p394 = pneg %p179
        %p395 = pneg %p203
        %p396 = pneg %p200
        %p397 = pneg %p224
        %p398 = pneg %p221
        %p399 = pneg %p250
        %p400 = pneg %p247
        %s401 = sand.u32 %s237, 1
        %s402 = scalar_lea.sflag [#allocation5], %s401
        %s403 = sand.u32 %s237, 1
        %s404 = smul.addr %s403, 2
        %s405 = scalar_lea.vmem [#allocation9], %s404
        %s406 = smul.u32 32, %s30
        %s407 = smul.u32 32, %s30
        %v409 = vld [vmem:[%s353] sm:$0xff]
        %v410 = vld [vmem:[%s353 + $0x8] sm:$0xff]
        %v411 = vld [vmem:[%s353 + $0x10] sm:$0xff]
        %v412 = vld [vmem:[%s353 + $0x18] sm:$0xff]
        %v413 = vld [vmem:[%s353 + $0x20] sm:$0xff]
        %v414 = vld [vmem:[%s353 + $0x28] sm:$0xff]
        %v415 = vld [vmem:[%s353 + $0x30] sm:$0xff]
        %v416 = vld [vmem:[%s353 + $0x38] sm:$0xff]
        %v417 = vld [vmem:[%s353 + $0x40] sm:$0xff]
        %v418 = vld [vmem:[%s353 + $0x48] sm:$0xff]
        %v419 = vld [vmem:[%s353 + $0x50] sm:$0xff]
        %v420 = vld [vmem:[%s353 + $0x58] sm:$0xff]
        %v421 = vld [vmem:[%s353 + $0x60] sm:$0xff]
        %v422 = vld [vmem:[%s353 + $0x68] sm:$0xff]
        %v423 = vld [vmem:[%s353 + $0x70] sm:$0xff]
        %v424 = vld [vmem:[%s353 + $0x78] sm:$0xff]
        %v425 = vld [vmem:[%s353 + $0x80] sm:$0xff]
        %v426 = vld [vmem:[%s353 + $0x88] sm:$0xff]
        %v427 = vld [vmem:[%s353 + $0x90] sm:$0xff]
        %v428 = vld [vmem:[%s353 + $0x98] sm:$0xff]
        %v429 = vld [vmem:[%s353 + $0xa0] sm:$0xff]
        %v430 = vld [vmem:[%s353 + $0xa8] sm:$0xff]
        %v431 = vld [vmem:[%s353 + $0xb0] sm:$0xff]
        %v432 = vld [vmem:[%s353 + $0xb8] sm:$0xff]
        %v433 = vld [vmem:[%s353 + $0xc0] sm:$0xff]
        %v434 = vld [vmem:[%s353 + $0xc8] sm:$0xff]
        %v435 = vld [vmem:[%s353 + $0xd0] sm:$0xff]
        %v436 = vld [vmem:[%s353 + $0xd8] sm:$0xff]
        %v437 = vld [vmem:[%s353 + $0xe0] sm:$0xff]
        %v438 = vld [vmem:[%s353 + $0xe8] sm:$0xff]
        %v439 = vld [vmem:[%s353 + $0xf0] sm:$0xff]
        %v440 = vld [vmem:[%s353 + $0xf8] sm:$0xff]
        %v441 = vpack.c.bf16 %v410, %v409
        %v442 = vpack.c.bf16 %v412, %v411
        %v443 = vpack.c.bf16 %v414, %v413
        %v444 = vpack.c.bf16 %v416, %v415
        %v445 = vpack.c.bf16 %v418, %v417
        %v446 = vpack.c.bf16 %v420, %v419
        %v447 = vpack.c.bf16 %v422, %v421
        %v448 = vpack.c.bf16 %v424, %v423
        %v449 = vpack.c.bf16 %v426, %v425
        %v450 = vpack.c.bf16 %v428, %v427
        %v451 = vpack.c.bf16 %v430, %v429
        %v452 = vpack.c.bf16 %v432, %v431
        %v453 = vpack.c.bf16 %v434, %v433
        %v454 = vpack.c.bf16 %v436, %v435
        %v455 = vpack.c.bf16 %v438, %v437
        %v456 = vpack.c.bf16 %v440, %v439
        %v457 = vld [vmem:[%s362] sm:$0xff]
        %v458 = vld [vmem:[%s362 + $0x8] sm:$0xff]
        %v459 = vld [vmem:[%s362 + $0x10] sm:$0xff]
        %v460 = vld [vmem:[%s362 + $0x18] sm:$0xff]
        %v461 = vld [vmem:[%s362 + $0x20] sm:$0xff]
        %v462 = vld [vmem:[%s362 + $0x28] sm:$0xff]
        %v463 = vld [vmem:[%s362 + $0x30] sm:$0xff]
        %v464 = vld [vmem:[%s362 + $0x38] sm:$0xff]
        %v465 = vld [vmem:[%s362 + $0x40] sm:$0xff]
        %v466 = vld [vmem:[%s362 + $0x48] sm:$0xff]
        %v467 = vld [vmem:[%s362 + $0x50] sm:$0xff]
        %v468 = vld [vmem:[%s362 + $0x58] sm:$0xff]
        %v469 = vld [vmem:[%s362 + $0x60] sm:$0xff]
        %v470 = vld [vmem:[%s362 + $0x68] sm:$0xff]
        %v471 = vld [vmem:[%s362 + $0x70] sm:$0xff]
        %v472 = vld [vmem:[%s362 + $0x78] sm:$0xff]
        %v473 = vld [vmem:[%s362 + $0x80] sm:$0xff]
        %v474 = vld [vmem:[%s362 + $0x88] sm:$0xff]
        %v475 = vld [vmem:[%s362 + $0x90] sm:$0xff]
        %v476 = vld [vmem:[%s362 + $0x98] sm:$0xff]
        %v477 = vld [vmem:[%s362 + $0xa0] sm:$0xff]
        %v478 = vld [vmem:[%s362 + $0xa8] sm:$0xff]
        %v479 = vld [vmem:[%s362 + $0xb0] sm:$0xff]
        %v480 = vld [vmem:[%s362 + $0xb8] sm:$0xff]
        %v481 = vld [vmem:[%s362 + $0xc0] sm:$0xff]
        %v482 = vld [vmem:[%s362 + $0xc8] sm:$0xff]
        %v483 = vld [vmem:[%s362 + $0xd0] sm:$0xff]
        %v484 = vld [vmem:[%s362 + $0xd8] sm:$0xff]
        %v485 = vld [vmem:[%s362 + $0xe0] sm:$0xff]
        %v486 = vld [vmem:[%s362 + $0xe8] sm:$0xff]
        %v487 = vld [vmem:[%s362 + $0xf0] sm:$0xff]
        %v488 = vld [vmem:[%s362 + $0xf8] sm:$0xff]
        %v489 = vpack.c.bf16 %v458, %v457
        %v490 = vpack.c.bf16 %v460, %v459
        %v491 = vpack.c.bf16 %v462, %v461
        %v492 = vpack.c.bf16 %v464, %v463
        %v493 = vpack.c.bf16 %v466, %v465
        %v494 = vpack.c.bf16 %v468, %v467
        %v495 = vpack.c.bf16 %v470, %v469
        %v496 = vpack.c.bf16 %v472, %v471
        %v497 = vpack.c.bf16 %v474, %v473
        %v498 = vpack.c.bf16 %v476, %v475
        %v499 = vpack.c.bf16 %v478, %v477
        %v500 = vpack.c.bf16 %v480, %v479
        %v501 = vpack.c.bf16 %v482, %v481
        %v502 = vpack.c.bf16 %v484, %v483
        %v503 = vpack.c.bf16 %v486, %v485
        %v504 = vpack.c.bf16 %v488, %v487
        %v505 = vld [vmem:[%s2] sm:$0xf]
        %v506 = vld [vmem:[%s2 + $0x4] sm:$0xf]
        %v507 = vld [vmem:[%s2 + $0x8] sm:$0xf]
        %v508 = vld [vmem:[%s2 + $0xc] sm:$0xf]
        %v509 = vld [vmem:[%s2 + $0x10] sm:$0xf]
        %v510 = vld [vmem:[%s2 + $0x14] sm:$0xf]
        %v511 = vld [vmem:[%s2 + $0x18] sm:$0xf]
        %v512 = vld [vmem:[%s2 + $0x1c] sm:$0xf]
        %v513 = vld [vmem:[%s2 + $0x20] sm:$0xf]
        %v514 = vld [vmem:[%s2 + $0x24] sm:$0xf]
        %v515 = vld [vmem:[%s2 + $0x28] sm:$0xf]
        %v516 = vld [vmem:[%s2 + $0x2c] sm:$0xf]
        %v517 = vld [vmem:[%s2 + $0x30] sm:$0xf]
        %v518 = vld [vmem:[%s2 + $0x34] sm:$0xf]
        %v519 = vld [vmem:[%s2 + $0x38] sm:$0xf]
        %v520 = vld [vmem:[%s2 + $0x3c] sm:$0xf]
        %v521 = vld [vmem:[%s3] sm:$0xf]
        %v522 = vld [vmem:[%s3 + $0x4] sm:$0xf]
        %v523 = vld [vmem:[%s3 + $0x8] sm:$0xf]
        %v524 = vld [vmem:[%s3 + $0xc] sm:$0xf]
        %v525 = vld [vmem:[%s3 + $0x10] sm:$0xf]
        %v526 = vld [vmem:[%s3 + $0x14] sm:$0xf]
        %v527 = vld [vmem:[%s3 + $0x18] sm:$0xf]
        %v528 = vld [vmem:[%s3 + $0x1c] sm:$0xf]
        %v529 = vld [vmem:[%s3 + $0x20] sm:$0xf]
        %v530 = vld [vmem:[%s3 + $0x24] sm:$0xf]
        %v531 = vld [vmem:[%s3 + $0x28] sm:$0xf]
        %v532 = vld [vmem:[%s3 + $0x2c] sm:$0xf]
        %v533 = vld [vmem:[%s3 + $0x30] sm:$0xf]
        %v534 = vld [vmem:[%s3 + $0x34] sm:$0xf]
        %v535 = vld [vmem:[%s3 + $0x38] sm:$0xf]
        %v536 = vld [vmem:[%s3 + $0x3c] sm:$0xf]
        %v553 = vunpack.c.l.b16 %v521
        %v554 = vunpack.c.l.b16 %v522
        %v555 = vunpack.c.l.b16 %v523
        %v556 = vunpack.c.l.b16 %v524
        %v557 = vunpack.c.l.b16 %v525
        %v558 = vunpack.c.l.b16 %v526
        %v559 = vunpack.c.l.b16 %v527
        %v560 = vunpack.c.l.b16 %v528
        %v561 = vunpack.c.l.b16 %v529
        %v562 = vunpack.c.l.b16 %v530
        %v563 = vunpack.c.l.b16 %v531
        %v564 = vunpack.c.l.b16 %v532
        %v565 = vunpack.c.l.b16 %v533
        %v566 = vunpack.c.l.b16 %v534
        %v567 = vunpack.c.l.b16 %v535
        %v568 = vunpack.c.l.b16 %v536
        %v569 = vpack.c.b16 %v554, %v553
        %v570 = vpack.c.b16 %v556, %v555
        %v571 = vpack.c.b16 %v558, %v557
        %v572 = vpack.c.b16 %v560, %v559
        %v573 = vpack.c.b16 %v562, %v561
        %v574 = vpack.c.b16 %v564, %v563
        %v575 = vpack.c.b16 %v566, %v565
        %v576 = vpack.c.b16 %v568, %v567
        %585 = vmatprep.subr.bf16.mxu0 0
        %586 = vmatpush1.bf16.msra.mxu0 %v576
        %587 = vmatprep.subr.bf16.mxu0 0
        %588 = vmatpush1.bf16.msra.mxu0 %v575
        %589 = vmatprep.subr.bf16.mxu0 0
        %590 = vmatpush1.bf16.msra.mxu0 %v574
        %591 = vmatprep.subr.bf16.mxu0 0
        %592 = vmatpush1.bf16.msra.mxu0 %v573
        %593 = vmatprep.subr.bf16.mxu0 0
        %594 = vmatpush1.bf16.msra.mxu0 %v572
        %595 = vmatprep.subr.bf16.mxu0 0
        %596 = vmatpush1.bf16.msra.mxu0 %v571
        %597 = vmatprep.subr.bf16.mxu0 0
        %598 = vmatpush1.bf16.msra.mxu0 %v570
        %599 = vmatprep.subr.bf16.mxu0 0
        %600 = vmatpush1.bf16.msra.mxu0 %v569
        %601 = vmatprep.subr.bf16.mxu0 0
        %602 = vmatpush2.bf16.msra.mxu0 0
        %603 = vmatprep.subr.bf16.mxu0 0
        %604 = vmatpush2.bf16.msra.mxu0 0
        %605 = vmatprep.subr.bf16.mxu0 0
        %606 = vmatpush2.bf16.msra.mxu0 0
        %607 = vmatprep.subr.bf16.mxu0 0
        %608 = vmatpush2.bf16.msra.mxu0 0
        %609 = vmatprep.subr.bf16.mxu0 0
        %610 = vmatpush2.bf16.msra.mxu0 0
        %611 = vmatprep.subr.bf16.mxu0 0
        %612 = vmatpush2.bf16.msra.mxu0 0
        %613 = vmatprep.subr.bf16.mxu0 0
        %614 = vmatpush2.bf16.msra.mxu0 0
        %615 = vmatprep.subr.bf16.mxu0 0
        %616 = vmatpush2.bf16.msra.mxu0 0
        %617 = vmatprep.mubr.bf16.mxu0 0
        %618 = vmatmul.mubr.bf16.gmra.mxu0 %v489
        %v619 = vpop.f32.mrf.mxu0
        %v620 = vadd.f32 0.0, %v619
        %v621 = vpop.f32.mrf.mxu0
        %v622 = vpop.f32.mrf.mxu0
        %v623 = vadd.f32 0.0, %v622
        %v624 = vpop.f32.mrf.mxu0
        %625 = vmatprep.mubr.bf16.mxu0 0
        %626 = vmatmul.mubr.bf16.gmra.mxu0 %v490
        %v627 = vpop.f32.mrf.mxu0
        %v628 = vadd.f32 0.0, %v627
        %v629 = vpop.f32.mrf.mxu0
        %v630 = vpop.f32.mrf.mxu0
        %v631 = vadd.f32 0.0, %v630
        %v632 = vpop.f32.mrf.mxu0
        %633 = vmatprep.mubr.bf16.mxu0 0
        %634 = vmatmul.mubr.bf16.gmra.mxu0 %v491
        %v635 = vpop.f32.mrf.mxu0
        %v636 = vadd.f32 0.0, %v635
        %v637 = vpop.f32.mrf.mxu0
        %v638 = vpop.f32.mrf.mxu0
        %v639 = vadd.f32 0.0, %v638
        %v640 = vpop.f32.mrf.mxu0
        %641 = vmatprep.mubr.bf16.mxu0 0
        %642 = vmatmul.mubr.bf16.gmra.mxu0 %v492
        %v643 = vpop.f32.mrf.mxu0
        %v644 = vadd.f32 0.0, %v643
        %v645 = vpop.f32.mrf.mxu0
        %v646 = vpop.f32.mrf.mxu0
        %v647 = vadd.f32 0.0, %v646
        %v648 = vpop.f32.mrf.mxu0
        %649 = vmatprep.mubr.bf16.mxu0 0
        %650 = vmatmul.mubr.bf16.gmra.mxu0 %v493
        %v651 = vpop.f32.mrf.mxu0
        %v652 = vadd.f32 0.0, %v651
        %v653 = vpop.f32.mrf.mxu0
        %v654 = vpop.f32.mrf.mxu0
        %v655 = vadd.f32 0.0, %v654
        %v656 = vpop.f32.mrf.mxu0
        %657 = vmatprep.mubr.bf16.mxu0 0
        %658 = vmatmul.mubr.bf16.gmra.mxu0 %v494
        %v659 = vpop.f32.mrf.mxu0
        %v660 = vadd.f32 0.0, %v659
        %v661 = vpop.f32.mrf.mxu0
        %v662 = vpop.f32.mrf.mxu0
        %v663 = vadd.f32 0.0, %v662
        %v664 = vpop.f32.mrf.mxu0
        %665 = vmatprep.mubr.bf16.mxu0 0
        %666 = vmatmul.mubr.bf16.gmra.mxu0 %v495
        %v667 = vpop.f32.mrf.mxu0
        %v668 = vadd.f32 0.0, %v667
        %v669 = vpop.f32.mrf.mxu0
        %v670 = vpop.f32.mrf.mxu0
        %v671 = vadd.f32 0.0, %v670
        %v672 = vpop.f32.mrf.mxu0
        %673 = vmatprep.mubr.bf16.mxu0 0
        %674 = vmatmul.mubr.bf16.gmra.mxu0 %v496
        %v675 = vpop.f32.mrf.mxu0
        %v676 = vadd.f32 0.0, %v675
        %v677 = vpop.f32.mrf.mxu0
        %v678 = vpop.f32.mrf.mxu0
        %v679 = vadd.f32 0.0, %v678
        %v680 = vpop.f32.mrf.mxu0
        %681 = vmatprep.mubr.bf16.mxu0 0
        %682 = vmatmul.mubr.bf16.gmra.mxu0 %v497
        %v683 = vpop.f32.mrf.mxu0
        %v684 = vadd.f32 0.0, %v683
        %v685 = vpop.f32.mrf.mxu0
        %v686 = vpop.f32.mrf.mxu0
        %v687 = vadd.f32 0.0, %v686
        %v688 = vpop.f32.mrf.mxu0
        %689 = vmatprep.mubr.bf16.mxu0 0
        %690 = vmatmul.mubr.bf16.gmra.mxu0 %v498
        %v691 = vpop.f32.mrf.mxu0
        %v692 = vadd.f32 0.0, %v691
        %v693 = vpop.f32.mrf.mxu0
        %v694 = vpop.f32.mrf.mxu0
        %v695 = vadd.f32 0.0, %v694
        %v696 = vpop.f32.mrf.mxu0
        %697 = vmatprep.mubr.bf16.mxu0 0
        %698 = vmatmul.mubr.bf16.gmra.mxu0 %v499
        %v699 = vpop.f32.mrf.mxu0
        %v700 = vadd.f32 0.0, %v699
        %v701 = vpop.f32.mrf.mxu0
        %v702 = vpop.f32.mrf.mxu0
        %v703 = vadd.f32 0.0, %v702
        %v704 = vpop.f32.mrf.mxu0
        %705 = vmatprep.mubr.bf16.mxu0 0
        %706 = vmatmul.mubr.bf16.gmra.mxu0 %v500
        %v707 = vpop.f32.mrf.mxu0
        %v708 = vadd.f32 0.0, %v707
        %v709 = vpop.f32.mrf.mxu0
        %v710 = vpop.f32.mrf.mxu0
        %v711 = vadd.f32 0.0, %v710
        %v712 = vpop.f32.mrf.mxu0
        %713 = vmatprep.mubr.bf16.mxu0 0
        %714 = vmatmul.mubr.bf16.gmra.mxu0 %v501
        %v715 = vpop.f32.mrf.mxu0
        %v716 = vadd.f32 0.0, %v715
        %v717 = vpop.f32.mrf.mxu0
        %v718 = vpop.f32.mrf.mxu0
        %v719 = vadd.f32 0.0, %v718
        %v720 = vpop.f32.mrf.mxu0
        %721 = vmatprep.mubr.bf16.mxu0 0
        %722 = vmatmul.mubr.bf16.gmra.mxu0 %v502
        %v723 = vpop.f32.mrf.mxu0
        %v724 = vadd.f32 0.0, %v723
        %v725 = vpop.f32.mrf.mxu0
        %v726 = vpop.f32.mrf.mxu0
        %v727 = vadd.f32 0.0, %v726
        %v728 = vpop.f32.mrf.mxu0
        %729 = vmatprep.mubr.bf16.mxu0 0
        %730 = vmatmul.mubr.bf16.gmra.mxu0 %v503
        %v731 = vpop.f32.mrf.mxu0
        %v732 = vadd.f32 0.0, %v731
        %v733 = vpop.f32.mrf.mxu0
        %v734 = vpop.f32.mrf.mxu0
        %v735 = vadd.f32 0.0, %v734
        %v736 = vpop.f32.mrf.mxu0
        %737 = vmatprep.mubr.bf16.mxu0 0
        %738 = vmatmul.mubr.bf16.gmra.mxu0 %v504
        %v739 = vpop.f32.mrf.mxu0
        %v740 = vadd.f32 0.0, %v739
        %v741 = vpop.f32.mrf.mxu0
        %v742 = vpop.f32.mrf.mxu0
        %v743 = vadd.f32 0.0, %v742
        %v744 = vpop.f32.mrf.mxu0
        %745 = vdwg.mxu0
        %v762 = vunpack.c.l.b16 %v505
        %v763 = vunpack.c.l.b16 %v506
        %v764 = vunpack.c.l.b16 %v507
        %v765 = vunpack.c.l.b16 %v508
        %v766 = vunpack.c.l.b16 %v509
        %v767 = vunpack.c.l.b16 %v510
        %v768 = vunpack.c.l.b16 %v511
        %v769 = vunpack.c.l.b16 %v512
        %v770 = vunpack.c.l.b16 %v513
        %v771 = vunpack.c.l.b16 %v514
        %v772 = vunpack.c.l.b16 %v515
        %v773 = vunpack.c.l.b16 %v516
        %v774 = vunpack.c.l.b16 %v517
        %v775 = vunpack.c.l.b16 %v518
        %v776 = vunpack.c.l.b16 %v519
        %v777 = vunpack.c.l.b16 %v520
        %v778 = vpack.c.b16 %v763, %v762
        %v779 = vpack.c.b16 %v765, %v764
        %v780 = vpack.c.b16 %v767, %v766
        %v781 = vpack.c.b16 %v769, %v768
        %v782 = vpack.c.b16 %v771, %v770
        %v783 = vpack.c.b16 %v773, %v772
        %v784 = vpack.c.b16 %v775, %v774
        %v785 = vpack.c.b16 %v777, %v776
        %794 = vmatprep.subr.bf16.mxu0 0
        %795 = vmatpush1.bf16.msra.mxu0 %v785
        %796 = vmatprep.subr.bf16.mxu0 0
        %797 = vmatpush1.bf16.msra.mxu0 %v784
        %798 = vmatprep.subr.bf16.mxu0 0
        %799 = vmatpush1.bf16.msra.mxu0 %v783
        %800 = vmatprep.subr.bf16.mxu0 0
        %801 = vmatpush1.bf16.msra.mxu0 %v782
        %802 = vmatprep.subr.bf16.mxu0 0
        %803 = vmatpush1.bf16.msra.mxu0 %v781
        %804 = vmatprep.subr.bf16.mxu0 0
        %805 = vmatpush1.bf16.msra.mxu0 %v780
        %806 = vmatprep.subr.bf16.mxu0 0
        %807 = vmatpush1.bf16.msra.mxu0 %v779
        %808 = vmatprep.subr.bf16.mxu0 0
        %809 = vmatpush1.bf16.msra.mxu0 %v778
        %810 = vmatprep.subr.bf16.mxu0 0
        %811 = vmatpush2.bf16.msra.mxu0 0
        %812 = vmatprep.subr.bf16.mxu0 0
        %813 = vmatpush2.bf16.msra.mxu0 0
        %814 = vmatprep.subr.bf16.mxu0 0
        %815 = vmatpush2.bf16.msra.mxu0 0
        %816 = vmatprep.subr.bf16.mxu0 0
        %817 = vmatpush2.bf16.msra.mxu0 0
        %818 = vmatprep.subr.bf16.mxu0 0
        %819 = vmatpush2.bf16.msra.mxu0 0
        %820 = vmatprep.subr.bf16.mxu0 0
        %821 = vmatpush2.bf16.msra.mxu0 0
        %822 = vmatprep.subr.bf16.mxu0 0
        %823 = vmatpush2.bf16.msra.mxu0 0
        %824 = vmatprep.subr.bf16.mxu0 0
        %825 = vmatpush2.bf16.msra.mxu0 0
        %826 = vmatprep.mubr.bf16.mxu0 0
        %827 = vmatmul.mubr.bf16.gmra.mxu0 %v441
        %v828 = vpop.f32.mrf.mxu0
        %v829 = vadd.f32 %v620, %v828
        %v830 = vpop.f32.mrf.mxu0
        %v831 = vpop.f32.mrf.mxu0
        %v832 = vadd.f32 %v623, %v831
        %v833 = vpop.f32.mrf.mxu0
        %834 = vmatprep.mubr.bf16.mxu0 0
        %835 = vmatmul.mubr.bf16.gmra.mxu0 %v442
        %v836 = vpop.f32.mrf.mxu0
        %v837 = vadd.f32 %v628, %v836
        %v838 = vpop.f32.mrf.mxu0
        %v839 = vpop.f32.mrf.mxu0
        %v840 = vadd.f32 %v631, %v839
        %v841 = vpop.f32.mrf.mxu0
        %842 = vmatprep.mubr.bf16.mxu0 0
        %843 = vmatmul.mubr.bf16.gmra.mxu0 %v443
        %v844 = vpop.f32.mrf.mxu0
        %v845 = vadd.f32 %v636, %v844
        %v846 = vpop.f32.mrf.mxu0
        %v847 = vpop.f32.mrf.mxu0
        %v848 = vadd.f32 %v639, %v847
        %v849 = vpop.f32.mrf.mxu0
        %850 = vmatprep.mubr.bf16.mxu0 0
        %851 = vmatmul.mubr.bf16.gmra.mxu0 %v444
        %v852 = vpop.f32.mrf.mxu0
        %v853 = vadd.f32 %v644, %v852
        %v854 = vpop.f32.mrf.mxu0
        %v855 = vpop.f32.mrf.mxu0
        %v856 = vadd.f32 %v647, %v855
        %v857 = vpop.f32.mrf.mxu0
        %858 = vmatprep.mubr.bf16.mxu0 0
        %859 = vmatmul.mubr.bf16.gmra.mxu0 %v445
        %v860 = vpop.f32.mrf.mxu0
        %v861 = vadd.f32 %v652, %v860
        %v862 = vpop.f32.mrf.mxu0
        %v863 = vpop.f32.mrf.mxu0
        %v864 = vadd.f32 %v655, %v863
        %v865 = vpop.f32.mrf.mxu0
        %866 = vmatprep.mubr.bf16.mxu0 0
        %867 = vmatmul.mubr.bf16.gmra.mxu0 %v446
        %v868 = vpop.f32.mrf.mxu0
        %v869 = vadd.f32 %v660, %v868
        %v870 = vpop.f32.mrf.mxu0
        %v871 = vpop.f32.mrf.mxu0
        %v872 = vadd.f32 %v663, %v871
        %v873 = vpop.f32.mrf.mxu0
        %874 = vmatprep.mubr.bf16.mxu0 0
        %875 = vmatmul.mubr.bf16.gmra.mxu0 %v447
        %v876 = vpop.f32.mrf.mxu0
        %v877 = vadd.f32 %v668, %v876
        %v878 = vpop.f32.mrf.mxu0
        %v879 = vpop.f32.mrf.mxu0
        %v880 = vadd.f32 %v671, %v879
        %v881 = vpop.f32.mrf.mxu0
        %882 = vmatprep.mubr.bf16.mxu0 0
        %883 = vmatmul.mubr.bf16.gmra.mxu0 %v448
        %v884 = vpop.f32.mrf.mxu0
        %v885 = vadd.f32 %v676, %v884
        %v886 = vpop.f32.mrf.mxu0
        %v887 = vpop.f32.mrf.mxu0
        %v888 = vadd.f32 %v679, %v887
        %v889 = vpop.f32.mrf.mxu0
        %890 = vmatprep.mubr.bf16.mxu0 0
        %891 = vmatmul.mubr.bf16.gmra.mxu0 %v449
        %v892 = vpop.f32.mrf.mxu0
        %v893 = vadd.f32 %v684, %v892
        %v894 = vpop.f32.mrf.mxu0
        %v895 = vpop.f32.mrf.mxu0
        %v896 = vadd.f32 %v687, %v895
        %v897 = vpop.f32.mrf.mxu0
        %898 = vmatprep.mubr.bf16.mxu0 0
        %899 = vmatmul.mubr.bf16.gmra.mxu0 %v450
        %v900 = vpop.f32.mrf.mxu0
        %v901 = vadd.f32 %v692, %v900
        %v902 = vpop.f32.mrf.mxu0
        %v903 = vpop.f32.mrf.mxu0
        %v904 = vadd.f32 %v695, %v903
        %v905 = vpop.f32.mrf.mxu0
        %906 = vmatprep.mubr.bf16.mxu0 0
        %907 = vmatmul.mubr.bf16.gmra.mxu0 %v451
        %v908 = vpop.f32.mrf.mxu0
        %v909 = vadd.f32 %v700, %v908
        %v910 = vpop.f32.mrf.mxu0
        %v911 = vpop.f32.mrf.mxu0
        %v912 = vadd.f32 %v703, %v911
        %v913 = vpop.f32.mrf.mxu0
        %914 = vmatprep.mubr.bf16.mxu0 0
        %915 = vmatmul.mubr.bf16.gmra.mxu0 %v452
        %v916 = vpop.f32.mrf.mxu0
        %v917 = vadd.f32 %v708, %v916
        %v918 = vpop.f32.mrf.mxu0
        %v919 = vpop.f32.mrf.mxu0
        %v920 = vadd.f32 %v711, %v919
        %v921 = vpop.f32.mrf.mxu0
        %922 = vmatprep.mubr.bf16.mxu0 0
        %923 = vmatmul.mubr.bf16.gmra.mxu0 %v453
        %v924 = vpop.f32.mrf.mxu0
        %v925 = vadd.f32 %v716, %v924
        %v926 = vpop.f32.mrf.mxu0
        %v927 = vpop.f32.mrf.mxu0
        %v928 = vadd.f32 %v719, %v927
        %v929 = vpop.f32.mrf.mxu0
        %930 = vmatprep.mubr.bf16.mxu0 0
        %931 = vmatmul.mubr.bf16.gmra.mxu0 %v454
        %v932 = vpop.f32.mrf.mxu0
        %v933 = vadd.f32 %v724, %v932
        %v934 = vpop.f32.mrf.mxu0
        %v935 = vpop.f32.mrf.mxu0
        %v936 = vadd.f32 %v727, %v935
        %v937 = vpop.f32.mrf.mxu0
        %938 = vmatprep.mubr.bf16.mxu0 0
        %939 = vmatmul.mubr.bf16.gmra.mxu0 %v455
        %v940 = vpop.f32.mrf.mxu0
        %v941 = vadd.f32 %v732, %v940
        %v942 = vpop.f32.mrf.mxu0
        %v943 = vpop.f32.mrf.mxu0
        %v944 = vadd.f32 %v735, %v943
        %v945 = vpop.f32.mrf.mxu0
        %946 = vmatprep.mubr.bf16.mxu0 0
        %947 = vmatmul.mubr.bf16.gmra.mxu0 %v456
        %v948 = vpop.f32.mrf.mxu0
        %v949 = vadd.f32 %v740, %v948
        %v950 = vpop.f32.mrf.mxu0
        %v951 = vpop.f32.mrf.mxu0
        %v952 = vadd.f32 %v743, %v951
        %v953 = vpop.f32.mrf.mxu0
        %954 = vdwg.mxu0
        %v955 = vld [vmem:[%s4] sm:$0x1]
        %v957 = vlaneseq
        %v958 = vshrl.u32 %v957, 7
        %v959 = vsub.s32 0, %v958
        %v960 = vrot.slane %v955, %v959
        %v962 = vadd.f32 %v829, %v960
        %v963 = vadd.f32 %v832, %v960
        %v964 = vadd.f32 %v837, %v960
        %v965 = vadd.f32 %v840, %v960
        %v966 = vadd.f32 %v845, %v960
        %v967 = vadd.f32 %v848, %v960
        %v968 = vadd.f32 %v853, %v960
        %v969 = vadd.f32 %v856, %v960
        %v970 = vadd.f32 %v861, %v960
        %v971 = vadd.f32 %v864, %v960
        %v972 = vadd.f32 %v869, %v960
        %v973 = vadd.f32 %v872, %v960
        %v974 = vadd.f32 %v877, %v960
        %v975 = vadd.f32 %v880, %v960
        %v976 = vadd.f32 %v885, %v960
        %v977 = vadd.f32 %v888, %v960
        %v978 = vadd.f32 %v893, %v960
        %v979 = vadd.f32 %v896, %v960
        %v980 = vadd.f32 %v901, %v960
        %v981 = vadd.f32 %v904, %v960
        %v982 = vadd.f32 %v909, %v960
        %v983 = vadd.f32 %v912, %v960
        %v984 = vadd.f32 %v917, %v960
        %v985 = vadd.f32 %v920, %v960
        %v986 = vadd.f32 %v925, %v960
        %v987 = vadd.f32 %v928, %v960
        %v988 = vadd.f32 %v933, %v960
        %v989 = vadd.f32 %v936, %v960
        %v990 = vadd.f32 %v941, %v960
        %v991 = vadd.f32 %v944, %v960
        %v992 = vadd.f32 %v949, %v960
        %v993 = vadd.f32 %v952, %v960
        %v994 = vxor.u32 %v962, 2147483648
        %v995 = vxor.u32 %v963, 2147483648
        %v996 = vxor.u32 %v964, 2147483648
        %v997 = vxor.u32 %v965, 2147483648
        %v998 = vxor.u32 %v966, 2147483648
        %v999 = vxor.u32 %v967, 2147483648
        %v1000 = vxor.u32 %v968, 2147483648
        %v1001 = vxor.u32 %v969, 2147483648
        %v1002 = vxor.u32 %v970, 2147483648
        %v1003 = vxor.u32 %v971, 2147483648
        %v1004 = vxor.u32 %v972, 2147483648
        %v1005 = vxor.u32 %v973, 2147483648
        %v1006 = vxor.u32 %v974, 2147483648
        %v1007 = vxor.u32 %v975, 2147483648
        %v1008 = vxor.u32 %v976, 2147483648
        %v1009 = vxor.u32 %v977, 2147483648
        %v1010 = vxor.u32 %v978, 2147483648
        %v1011 = vxor.u32 %v979, 2147483648
        %v1012 = vxor.u32 %v980, 2147483648
        %v1013 = vxor.u32 %v981, 2147483648
        %v1014 = vxor.u32 %v982, 2147483648
        %v1015 = vxor.u32 %v983, 2147483648
        %v1016 = vxor.u32 %v984, 2147483648
        %v1017 = vxor.u32 %v985, 2147483648
        %v1018 = vxor.u32 %v986, 2147483648
        %v1019 = vxor.u32 %v987, 2147483648
        %v1020 = vxor.u32 %v988, 2147483648
        %v1021 = vxor.u32 %v989, 2147483648
        %v1022 = vxor.u32 %v990, 2147483648
        %v1023 = vxor.u32 %v991, 2147483648
        %v1024 = vxor.u32 %v992, 2147483648
        %v1025 = vxor.u32 %v993, 2147483648
        %v1026 = vmul.f32 %v994, 1.442695
        %v1027 = vpow.pop %v1026
        %v1028 = vmul.f32 %v995, 1.442695
        %v1029 = vpow.pop %v1028
        %v1030 = vmul.f32 %v996, 1.442695
        %v1031 = vpow.pop %v1030
        %v1032 = vmul.f32 %v997, 1.442695
        %v1033 = vpow.pop %v1032
        %v1034 = vmul.f32 %v998, 1.442695
        %v1035 = vpow.pop %v1034
        %v1036 = vmul.f32 %v999, 1.442695
        %v1037 = vpow.pop %v1036
        %v1038 = vmul.f32 %v1000, 1.442695
        %v1039 = vpow.pop %v1038
        %v1040 = vmul.f32 %v1001, 1.442695
        %v1041 = vpow.pop %v1040
        %v1042 = vmul.f32 %v1002, 1.442695
        %v1043 = vpow.pop %v1042
        %v1044 = vmul.f32 %v1003, 1.442695
        %v1045 = vpow.pop %v1044
        %v1046 = vmul.f32 %v1004, 1.442695
        %v1047 = vpow.pop %v1046
        %v1048 = vmul.f32 %v1005, 1.442695
        %v1049 = vpow.pop %v1048
        %v1050 = vmul.f32 %v1006, 1.442695
        %v1051 = vpow.pop %v1050
        %v1052 = vmul.f32 %v1007, 1.442695
        %v1053 = vpow.pop %v1052
        %v1054 = vmul.f32 %v1008, 1.442695
        %v1055 = vpow.pop %v1054
        %v1056 = vmul.f32 %v1009, 1.442695
        %v1057 = vpow.pop %v1056
        %v1058 = vmul.f32 %v1010, 1.442695
        %v1059 = vpow.pop %v1058
        %v1060 = vmul.f32 %v1011, 1.442695
        %v1061 = vpow.pop %v1060
        %v1062 = vmul.f32 %v1012, 1.442695
        %v1063 = vpow.pop %v1062
        %v1064 = vmul.f32 %v1013, 1.442695
        %v1065 = vpow.pop %v1064
        %v1066 = vmul.f32 %v1014, 1.442695
        %v1067 = vpow.pop %v1066
        %v1068 = vmul.f32 %v1015, 1.442695
        %v1069 = vpow.pop %v1068
        %v1070 = vmul.f32 %v1016, 1.442695
        %v1071 = vpow.pop %v1070
        %v1072 = vmul.f32 %v1017, 1.442695
        %v1073 = vpow.pop %v1072
        %v1074 = vmul.f32 %v1018, 1.442695
        %v1075 = vpow.pop %v1074
        %v1076 = vmul.f32 %v1019, 1.442695
        %v1077 = vpow.pop %v1076
        %v1078 = vmul.f32 %v1020, 1.442695
        %v1079 = vpow.pop %v1078
        %v1080 = vmul.f32 %v1021, 1.442695
        %v1081 = vpow.pop %v1080
        %v1082 = vmul.f32 %v1022, 1.442695
        %v1083 = vpow.pop %v1082
        %v1084 = vmul.f32 %v1023, 1.442695
        %v1085 = vpow.pop %v1084
        %v1086 = vmul.f32 %v1024, 1.442695
        %v1087 = vpow.pop %v1086
        %v1088 = vmul.f32 %v1025, 1.442695
        %v1089 = vpow.pop %v1088
        %v1090 = vadd.f32 %v1027, 1.0
        %v1091 = vadd.f32 %v1029, 1.0
        %v1092 = vadd.f32 %v1031, 1.0
        %v1093 = vadd.f32 %v1033, 1.0
        %v1094 = vadd.f32 %v1035, 1.0
        %v1095 = vadd.f32 %v1037, 1.0
        %v1096 = vadd.f32 %v1039, 1.0
        %v1097 = vadd.f32 %v1041, 1.0
        %v1098 = vadd.f32 %v1043, 1.0
        %v1099 = vadd.f32 %v1045, 1.0
        %v1100 = vadd.f32 %v1047, 1.0
        %v1101 = vadd.f32 %v1049, 1.0
        %v1102 = vadd.f32 %v1051, 1.0
        %v1103 = vadd.f32 %v1053, 1.0
        %v1104 = vadd.f32 %v1055, 1.0
        %v1105 = vadd.f32 %v1057, 1.0
        %v1106 = vadd.f32 %v1059, 1.0
        %v1107 = vadd.f32 %v1061, 1.0
        %v1108 = vadd.f32 %v1063, 1.0
        %v1109 = vadd.f32 %v1065, 1.0
        %v1110 = vadd.f32 %v1067, 1.0
        %v1111 = vadd.f32 %v1069, 1.0
        %v1112 = vadd.f32 %v1071, 1.0
        %v1113 = vadd.f32 %v1073, 1.0
        %v1114 = vadd.f32 %v1075, 1.0
        %v1115 = vadd.f32 %v1077, 1.0
        %v1116 = vadd.f32 %v1079, 1.0
        %v1117 = vadd.f32 %v1081, 1.0
        %v1118 = vadd.f32 %v1083, 1.0
        %v1119 = vadd.f32 %v1085, 1.0
        %v1120 = vadd.f32 %v1087, 1.0
        %v1121 = vadd.f32 %v1089, 1.0
        %v1122 = vrcp.pop %v1090
        %v1123 = vmul.f32 1.0, %v1122
        %v1124 = vrcp.pop %v1091
        %v1125 = vmul.f32 1.0, %v1124
        %v1126 = vrcp.pop %v1092
        %v1127 = vmul.f32 1.0, %v1126
        %v1128 = vrcp.pop %v1093
        %v1129 = vmul.f32 1.0, %v1128
        %v1130 = vrcp.pop %v1094
        %v1131 = vmul.f32 1.0, %v1130
        %v1132 = vrcp.pop %v1095
        %v1133 = vmul.f32 1.0, %v1132
        %v1134 = vrcp.pop %v1096
        %v1135 = vmul.f32 1.0, %v1134
        %v1136 = vrcp.pop %v1097
        %v1137 = vmul.f32 1.0, %v1136
        %v1138 = vrcp.pop %v1098
        %v1139 = vmul.f32 1.0, %v1138
        %v1140 = vrcp.pop %v1099
        %v1141 = vmul.f32 1.0, %v1140
        %v1142 = vrcp.pop %v1100
        %v1143 = vmul.f32 1.0, %v1142
        %v1144 = vrcp.pop %v1101
        %v1145 = vmul.f32 1.0, %v1144
        %v1146 = vrcp.pop %v1102
        %v1147 = vmul.f32 1.0, %v1146
        %v1148 = vrcp.pop %v1103
        %v1149 = vmul.f32 1.0, %v1148
        %v1150 = vrcp.pop %v1104
        %v1151 = vmul.f32 1.0, %v1150
        %v1152 = vrcp.pop %v1105
        %v1153 = vmul.f32 1.0, %v1152
        %v1154 = vrcp.pop %v1106
        %v1155 = vmul.f32 1.0, %v1154
        %v1156 = vrcp.pop %v1107
        %v1157 = vmul.f32 1.0, %v1156
        %v1158 = vrcp.pop %v1108
        %v1159 = vmul.f32 1.0, %v1158
        %v1160 = vrcp.pop %v1109
        %v1161 = vmul.f32 1.0, %v1160
        %v1162 = vrcp.pop %v1110
        %v1163 = vmul.f32 1.0, %v1162
        %v1164 = vrcp.pop %v1111
        %v1165 = vmul.f32 1.0, %v1164
        %v1166 = vrcp.pop %v1112
        %v1167 = vmul.f32 1.0, %v1166
        %v1168 = vrcp.pop %v1113
        %v1169 = vmul.f32 1.0, %v1168
        %v1170 = vrcp.pop %v1114
        %v1171 = vmul.f32 1.0, %v1170
        %v1172 = vrcp.pop %v1115
        %v1173 = vmul.f32 1.0, %v1172
        %v1174 = vrcp.pop %v1116
        %v1175 = vmul.f32 1.0, %v1174
        %v1176 = vrcp.pop %v1117
        %v1177 = vmul.f32 1.0, %v1176
        %v1178 = vrcp.pop %v1118
        %v1179 = vmul.f32 1.0, %v1178
        %v1180 = vrcp.pop %v1119
        %v1181 = vmul.f32 1.0, %v1180
        %v1182 = vrcp.pop %v1120
        %v1183 = vmul.f32 1.0, %v1182
        %v1184 = vrcp.pop %v1121
        %v1185 = vmul.f32 1.0, %v1184
        %v1186 = vmul.f32 %v962, %v1123
        %v1187 = vmul.f32 %v963, %v1125
        %v1188 = vmul.f32 %v964, %v1127
        %v1189 = vmul.f32 %v965, %v1129
        %v1190 = vmul.f32 %v966, %v1131
        %v1191 = vmul.f32 %v967, %v1133
        %v1192 = vmul.f32 %v968, %v1135
        %v1193 = vmul.f32 %v969, %v1137
        %v1194 = vmul.f32 %v970, %v1139
        %v1195 = vmul.f32 %v971, %v1141
        %v1196 = vmul.f32 %v972, %v1143
        %v1197 = vmul.f32 %v973, %v1145
        %v1198 = vmul.f32 %v974, %v1147
        %v1199 = vmul.f32 %v975, %v1149
        %v1200 = vmul.f32 %v976, %v1151
        %v1201 = vmul.f32 %v977, %v1153
        %v1202 = vmul.f32 %v978, %v1155
        %v1203 = vmul.f32 %v979, %v1157
        %v1204 = vmul.f32 %v980, %v1159
        %v1205 = vmul.f32 %v981, %v1161
        %v1206 = vmul.f32 %v982, %v1163
        %v1207 = vmul.f32 %v983, %v1165
        %v1208 = vmul.f32 %v984, %v1167
        %v1209 = vmul.f32 %v985, %v1169
        %v1210 = vmul.f32 %v986, %v1171
        %v1211 = vmul.f32 %v987, %v1173
        %v1212 = vmul.f32 %v988, %v1175
        %v1213 = vmul.f32 %v989, %v1177
        %v1214 = vmul.f32 %v990, %v1179
        %v1215 = vmul.f32 %v991, %v1181
        %v1216 = vmul.f32 %v992, %v1183
        %v1217 = vmul.f32 %v993, %v1185
        %v1218 = vpack.c.bf16 %v1187, %v1186
        %v1219 = vpack.c.bf16 %v1189, %v1188
        %v1220 = vpack.c.bf16 %v1191, %v1190
        %v1221 = vpack.c.bf16 %v1193, %v1192
        %v1222 = vpack.c.bf16 %v1195, %v1194
        %v1223 = vpack.c.bf16 %v1197, %v1196
        %v1224 = vpack.c.bf16 %v1199, %v1198
        %v1225 = vpack.c.bf16 %v1201, %v1200
        %v1226 = vpack.c.bf16 %v1203, %v1202
        %v1227 = vpack.c.bf16 %v1205, %v1204
        %v1228 = vpack.c.bf16 %v1207, %v1206
        %v1229 = vpack.c.bf16 %v1209, %v1208
        %v1230 = vpack.c.bf16 %v1211, %v1210
        %v1231 = vpack.c.bf16 %v1213, %v1212
        %v1232 = vpack.c.bf16 %v1215, %v1214
        %v1233 = vpack.c.bf16 %v1217, %v1216
        %v1234 = vld [vmem:[#allocation8] sm:$0xf]
        %v1235 = vld [vmem:[#allocation8 + $0x4] sm:$0xf]
        %v1236 = vld [vmem:[#allocation8 + $0x8] sm:$0xf]
        %v1237 = vld [vmem:[#allocation8 + $0xc] sm:$0xf]
        %v1238 = vld [vmem:[#allocation8 + $0x10] sm:$0xf]
        %v1239 = vld [vmem:[#allocation8 + $0x14] sm:$0xf]
        %v1240 = vld [vmem:[#allocation8 + $0x18] sm:$0xf]
        %v1241 = vld [vmem:[#allocation8 + $0x1c] sm:$0xf]
        %v1242 = vld [vmem:[#allocation8 + $0x20] sm:$0xf]
        %v1243 = vld [vmem:[#allocation8 + $0x24] sm:$0xf]
        %v1244 = vld [vmem:[#allocation8 + $0x28] sm:$0xf]
        %v1245 = vld [vmem:[#allocation8 + $0x2c] sm:$0xf]
        %v1246 = vld [vmem:[#allocation8 + $0x30] sm:$0xf]
        %v1247 = vld [vmem:[#allocation8 + $0x34] sm:$0xf]
        %v1248 = vld [vmem:[#allocation8 + $0x38] sm:$0xf]
        %v1249 = vld [vmem:[#allocation8 + $0x3c] sm:$0xf]
        %v1250 = vld [vmem:[%s6] sm:$0x1]
        %v1252 = vlaneseq
        %v1253 = vshrl.u32 %v1252, 7
        %v1254 = vsub.s32 0, %v1253
        %v1255 = vrot.slane %v1250, %v1254
        %v1273 = vunpack.c.l.b16 %v1234
        %v1274 = vunpack.c.l.b16 %v1235
        %v1275 = vunpack.c.l.b16 %v1236
        %v1276 = vunpack.c.l.b16 %v1237
        %v1277 = vunpack.c.l.b16 %v1238
        %v1278 = vunpack.c.l.b16 %v1239
        %v1279 = vunpack.c.l.b16 %v1240
        %v1280 = vunpack.c.l.b16 %v1241
        %v1281 = vunpack.c.l.b16 %v1242
        %v1282 = vunpack.c.l.b16 %v1243
        %v1283 = vunpack.c.l.b16 %v1244
        %v1284 = vunpack.c.l.b16 %v1245
        %v1285 = vunpack.c.l.b16 %v1246
        %v1286 = vunpack.c.l.b16 %v1247
        %v1287 = vunpack.c.l.b16 %v1248
        %v1288 = vunpack.c.l.b16 %v1249
        %v1289 = vpack.c.b16 %v1274, %v1273
        %v1290 = vpack.c.b16 %v1276, %v1275
        %v1291 = vpack.c.b16 %v1278, %v1277
        %v1292 = vpack.c.b16 %v1280, %v1279
        %v1293 = vpack.c.b16 %v1282, %v1281
        %v1294 = vpack.c.b16 %v1284, %v1283
        %v1295 = vpack.c.b16 %v1286, %v1285
        %v1296 = vpack.c.b16 %v1288, %v1287
        %1305 = vmatprep.subr.bf16.mxu0 0
        %1306 = vmatpush1.bf16.msra.mxu0 %v1296
        %1307 = vmatprep.subr.bf16.mxu0 0
        %1308 = vmatpush1.bf16.msra.mxu0 %v1295
        %1309 = vmatprep.subr.bf16.mxu0 0
        %1310 = vmatpush1.bf16.msra.mxu0 %v1294
        %1311 = vmatprep.subr.bf16.mxu0 0
        %1312 = vmatpush1.bf16.msra.mxu0 %v1293
        %1313 = vmatprep.subr.bf16.mxu0 0
        %1314 = vmatpush1.bf16.msra.mxu0 %v1292
        %1315 = vmatprep.subr.bf16.mxu0 0
        %1316 = vmatpush1.bf16.msra.mxu0 %v1291
        %1317 = vmatprep.subr.bf16.mxu0 0
        %1318 = vmatpush1.bf16.msra.mxu0 %v1290
        %1319 = vmatprep.subr.bf16.mxu0 0
        %1320 = vmatpush1.bf16.msra.mxu0 %v1289
        %1321 = vmatprep.subr.bf16.mxu0 0
        %1322 = vmatpush2.bf16.msra.mxu0 0
        %1323 = vmatprep.subr.bf16.mxu0 0
        %1324 = vmatpush2.bf16.msra.mxu0 0
        %1325 = vmatprep.subr.bf16.mxu0 0
        %1326 = vmatpush2.bf16.msra.mxu0 0
        %1327 = vmatprep.subr.bf16.mxu0 0
        %1328 = vmatpush2.bf16.msra.mxu0 0
        %1329 = vmatprep.subr.bf16.mxu0 0
        %1330 = vmatpush2.bf16.msra.mxu0 0
        %1331 = vmatprep.subr.bf16.mxu0 0
        %1332 = vmatpush2.bf16.msra.mxu0 0
        %1333 = vmatprep.subr.bf16.mxu0 0
        %1334 = vmatpush2.bf16.msra.mxu0 0
        %1335 = vmatprep.subr.bf16.mxu0 0
        %1336 = vmatpush2.bf16.msra.mxu0 0
        %1337 = vmatprep.mubr.bf16.mxu0 0
        %1338 = vmatmul.mubr.bf16.gmra.mxu0 %v1218
        %v1339 = vpop.f32.mrf.mxu0
        %v1340 = vadd.f32 %v1255, %v1339
        %v1341 = vpop.f32.mrf.mxu0
        %v1342 = vpop.f32.mrf.mxu0
        %v1343 = vadd.f32 %v1255, %v1342
        %v1344 = vpop.f32.mrf.mxu0
        %1345 = vmatprep.mubr.bf16.mxu0 0
        %1346 = vmatmul.mubr.bf16.gmra.mxu0 %v1219
        %v1347 = vpop.f32.mrf.mxu0
        %v1348 = vadd.f32 %v1255, %v1347
        %v1349 = vpop.f32.mrf.mxu0
        %v1350 = vpop.f32.mrf.mxu0
        %v1351 = vadd.f32 %v1255, %v1350
        %v1352 = vpop.f32.mrf.mxu0
        %1353 = vmatprep.mubr.bf16.mxu0 0
        %1354 = vmatmul.mubr.bf16.gmra.mxu0 %v1220
        %v1355 = vpop.f32.mrf.mxu0
        %v1356 = vadd.f32 %v1255, %v1355
        %v1357 = vpop.f32.mrf.mxu0
        %v1358 = vpop.f32.mrf.mxu0
        %v1359 = vadd.f32 %v1255, %v1358
        %v1360 = vpop.f32.mrf.mxu0
        %1361 = vmatprep.mubr.bf16.mxu0 0
        %1362 = vmatmul.mubr.bf16.gmra.mxu0 %v1221
        %v1363 = vpop.f32.mrf.mxu0
        %v1364 = vadd.f32 %v1255, %v1363
        %v1365 = vpop.f32.mrf.mxu0
        %v1366 = vpop.f32.mrf.mxu0
        %v1367 = vadd.f32 %v1255, %v1366
        %v1368 = vpop.f32.mrf.mxu0
        %1369 = vmatprep.mubr.bf16.mxu0 0
        %1370 = vmatmul.mubr.bf16.gmra.mxu0 %v1222
        %v1371 = vpop.f32.mrf.mxu0
        %v1372 = vadd.f32 %v1255, %v1371
        %v1373 = vpop.f32.mrf.mxu0
        %v1374 = vpop.f32.mrf.mxu0
        %v1375 = vadd.f32 %v1255, %v1374
        %v1376 = vpop.f32.mrf.mxu0
        %1377 = vmatprep.mubr.bf16.mxu0 0
        %1378 = vmatmul.mubr.bf16.gmra.mxu0 %v1223
        %v1379 = vpop.f32.mrf.mxu0
        %v1380 = vadd.f32 %v1255, %v1379
        %v1381 = vpop.f32.mrf.mxu0
        %v1382 = vpop.f32.mrf.mxu0
        %v1383 = vadd.f32 %v1255, %v1382
        %v1384 = vpop.f32.mrf.mxu0
        %1385 = vmatprep.mubr.bf16.mxu0 0
        %1386 = vmatmul.mubr.bf16.gmra.mxu0 %v1224
        %v1387 = vpop.f32.mrf.mxu0
        %v1388 = vadd.f32 %v1255, %v1387
        %v1389 = vpop.f32.mrf.mxu0
        %v1390 = vpop.f32.mrf.mxu0
        %v1391 = vadd.f32 %v1255, %v1390
        %v1392 = vpop.f32.mrf.mxu0
        %1393 = vmatprep.mubr.bf16.mxu0 0
        %1394 = vmatmul.mubr.bf16.gmra.mxu0 %v1225
        %v1395 = vpop.f32.mrf.mxu0
        %v1396 = vadd.f32 %v1255, %v1395
        %v1397 = vpop.f32.mrf.mxu0
        %v1398 = vpop.f32.mrf.mxu0
        %v1399 = vadd.f32 %v1255, %v1398
        %v1400 = vpop.f32.mrf.mxu0
        %1401 = vmatprep.mubr.bf16.mxu0 0
        %1402 = vmatmul.mubr.bf16.gmra.mxu0 %v1226
        %v1403 = vpop.f32.mrf.mxu0
        %v1404 = vadd.f32 %v1255, %v1403
        %v1405 = vpop.f32.mrf.mxu0
        %v1406 = vpop.f32.mrf.mxu0
        %v1407 = vadd.f32 %v1255, %v1406
        %v1408 = vpop.f32.mrf.mxu0
        %1409 = vmatprep.mubr.bf16.mxu0 0
        %1410 = vmatmul.mubr.bf16.gmra.mxu0 %v1227
        %v1411 = vpop.f32.mrf.mxu0
        %v1412 = vadd.f32 %v1255, %v1411
        %v1413 = vpop.f32.mrf.mxu0
        %v1414 = vpop.f32.mrf.mxu0
        %v1415 = vadd.f32 %v1255, %v1414
        %v1416 = vpop.f32.mrf.mxu0
        %1417 = vmatprep.mubr.bf16.mxu0 0
        %1418 = vmatmul.mubr.bf16.gmra.mxu0 %v1228
        %v1419 = vpop.f32.mrf.mxu0
        %v1420 = vadd.f32 %v1255, %v1419
        %v1421 = vpop.f32.mrf.mxu0
        %v1422 = vpop.f32.mrf.mxu0
        %v1423 = vadd.f32 %v1255, %v1422
        %v1424 = vpop.f32.mrf.mxu0
        %1425 = vmatprep.mubr.bf16.mxu0 0
        %1426 = vmatmul.mubr.bf16.gmra.mxu0 %v1229
        %v1427 = vpop.f32.mrf.mxu0
        %v1428 = vadd.f32 %v1255, %v1427
        %v1429 = vpop.f32.mrf.mxu0
        %v1430 = vpop.f32.mrf.mxu0
        %v1431 = vadd.f32 %v1255, %v1430
        %v1432 = vpop.f32.mrf.mxu0
        %1433 = vmatprep.mubr.bf16.mxu0 0
        %1434 = vmatmul.mubr.bf16.gmra.mxu0 %v1230
        %v1435 = vpop.f32.mrf.mxu0
        %v1436 = vadd.f32 %v1255, %v1435
        %v1437 = vpop.f32.mrf.mxu0
        %v1438 = vpop.f32.mrf.mxu0
        %v1439 = vadd.f32 %v1255, %v1438
        %v1440 = vpop.f32.mrf.mxu0
        %1441 = vmatprep.mubr.bf16.mxu0 0
        %1442 = vmatmul.mubr.bf16.gmra.mxu0 %v1231
        %v1443 = vpop.f32.mrf.mxu0
        %v1444 = vadd.f32 %v1255, %v1443
        %v1445 = vpop.f32.mrf.mxu0
        %v1446 = vpop.f32.mrf.mxu0
        %v1447 = vadd.f32 %v1255, %v1446
        %v1448 = vpop.f32.mrf.mxu0
        %1449 = vmatprep.mubr.bf16.mxu0 0
        %1450 = vmatmul.mubr.bf16.gmra.mxu0 %v1232
        %v1451 = vpop.f32.mrf.mxu0
        %v1452 = vadd.f32 %v1255, %v1451
        %v1453 = vpop.f32.mrf.mxu0
        %v1454 = vpop.f32.mrf.mxu0
        %v1455 = vadd.f32 %v1255, %v1454
        %v1456 = vpop.f32.mrf.mxu0
        %1457 = vmatprep.mubr.bf16.mxu0 0
        %1458 = vmatmul.mubr.bf16.gmra.mxu0 %v1233
        %v1459 = vpop.f32.mrf.mxu0
        %v1460 = vadd.f32 %v1255, %v1459
        %v1461 = vpop.f32.mrf.mxu0
        %v1462 = vpop.f32.mrf.mxu0
        %v1463 = vadd.f32 %v1255, %v1462
        %v1464 = vpop.f32.mrf.mxu0
        %1465 = vdwg.mxu0
        %v1466 = vxor.u32 %v1340, 2147483648
        %v1467 = vxor.u32 %v1343, 2147483648
        %v1468 = vxor.u32 %v1348, 2147483648
        %v1469 = vxor.u32 %v1351, 2147483648
        %v1470 = vxor.u32 %v1356, 2147483648
        %v1471 = vxor.u32 %v1359, 2147483648
        %v1472 = vxor.u32 %v1364, 2147483648
        %v1473 = vxor.u32 %v1367, 2147483648
        %v1474 = vxor.u32 %v1372, 2147483648
        %v1475 = vxor.u32 %v1375, 2147483648
        %v1476 = vxor.u32 %v1380, 2147483648
        %v1477 = vxor.u32 %v1383, 2147483648
        %v1478 = vxor.u32 %v1388, 2147483648
        %v1479 = vxor.u32 %v1391, 2147483648
        %v1480 = vxor.u32 %v1396, 2147483648
        %v1481 = vxor.u32 %v1399, 2147483648
        %v1482 = vxor.u32 %v1404, 2147483648
        %v1483 = vxor.u32 %v1407, 2147483648
        %v1484 = vxor.u32 %v1412, 2147483648
        %v1485 = vxor.u32 %v1415, 2147483648
        %v1486 = vxor.u32 %v1420, 2147483648
        %v1487 = vxor.u32 %v1423, 2147483648
        %v1488 = vxor.u32 %v1428, 2147483648
        %v1489 = vxor.u32 %v1431, 2147483648
        %v1490 = vxor.u32 %v1436, 2147483648
        %v1491 = vxor.u32 %v1439, 2147483648
        %v1492 = vxor.u32 %v1444, 2147483648
        %v1493 = vxor.u32 %v1447, 2147483648
        %v1494 = vxor.u32 %v1452, 2147483648
        %v1495 = vxor.u32 %v1455, 2147483648
        %v1496 = vxor.u32 %v1460, 2147483648
        %v1497 = vxor.u32 %v1463, 2147483648
        %v1498 = vmul.f32 %v1466, 1.442695
        %v1499 = vpow.pop %v1498
        %v1500 = vmul.f32 %v1467, 1.442695
        %v1501 = vpow.pop %v1500
        %v1502 = vmul.f32 %v1468, 1.442695
        %v1503 = vpow.pop %v1502
        %v1504 = vmul.f32 %v1469, 1.442695
        %v1505 = vpow.pop %v1504
        %v1506 = vmul.f32 %v1470, 1.442695
        %v1507 = vpow.pop %v1506
        %v1508 = vmul.f32 %v1471, 1.442695
        %v1509 = vpow.pop %v1508
        %v1510 = vmul.f32 %v1472, 1.442695
        %v1511 = vpow.pop %v1510
        %v1512 = vmul.f32 %v1473, 1.442695
        %v1513 = vpow.pop %v1512
        %v1514 = vmul.f32 %v1474, 1.442695
        %v1515 = vpow.pop %v1514
        %v1516 = vmul.f32 %v1475, 1.442695
        %v1517 = vpow.pop %v1516
        %v1518 = vmul.f32 %v1476, 1.442695
        %v1519 = vpow.pop %v1518
        %v1520 = vmul.f32 %v1477, 1.442695
        %v1521 = vpow.pop %v1520
        %v1522 = vmul.f32 %v1478, 1.442695
        %v1523 = vpow.pop %v1522
        %v1524 = vmul.f32 %v1479, 1.442695
        %v1525 = vpow.pop %v1524
        %v1526 = vmul.f32 %v1480, 1.442695
        %v1527 = vpow.pop %v1526
        %v1528 = vmul.f32 %v1481, 1.442695
        %v1529 = vpow.pop %v1528
        %v1530 = vmul.f32 %v1482, 1.442695
        %v1531 = vpow.pop %v1530
        %v1532 = vmul.f32 %v1483, 1.442695
        %v1533 = vpow.pop %v1532
        %v1534 = vmul.f32 %v1484, 1.442695
        %v1535 = vpow.pop %v1534
        %v1536 = vmul.f32 %v1485, 1.442695
        %v1537 = vpow.pop %v1536
        %v1538 = vmul.f32 %v1486, 1.442695
        %v1539 = vpow.pop %v1538
        %v1540 = vmul.f32 %v1487, 1.442695
        %v1541 = vpow.pop %v1540
        %v1542 = vmul.f32 %v1488, 1.442695
        %v1543 = vpow.pop %v1542
        %v1544 = vmul.f32 %v1489, 1.442695
        %v1545 = vpow.pop %v1544
        %v1546 = vmul.f32 %v1490, 1.442695
        %v1547 = vpow.pop %v1546
        %v1548 = vmul.f32 %v1491, 1.442695
        %v1549 = vpow.pop %v1548
        %v1550 = vmul.f32 %v1492, 1.442695
        %v1551 = vpow.pop %v1550
        %v1552 = vmul.f32 %v1493, 1.442695
        %v1553 = vpow.pop %v1552
        %v1554 = vmul.f32 %v1494, 1.442695
        %v1555 = vpow.pop %v1554
        %v1556 = vmul.f32 %v1495, 1.442695
        %v1557 = vpow.pop %v1556
        %v1558 = vmul.f32 %v1496, 1.442695
        %v1559 = vpow.pop %v1558
        %v1560 = vmul.f32 %v1497, 1.442695
        %v1561 = vpow.pop %v1560
        %v1562 = vadd.f32 %v1499, 1.0
        %v1563 = vadd.f32 %v1501, 1.0
        %v1564 = vadd.f32 %v1503, 1.0
        %v1565 = vadd.f32 %v1505, 1.0
        %v1566 = vadd.f32 %v1507, 1.0
        %v1567 = vadd.f32 %v1509, 1.0
        %v1568 = vadd.f32 %v1511, 1.0
        %v1569 = vadd.f32 %v1513, 1.0
        %v1570 = vadd.f32 %v1515, 1.0
        %v1571 = vadd.f32 %v1517, 1.0
        %v1572 = vadd.f32 %v1519, 1.0
        %v1573 = vadd.f32 %v1521, 1.0
        %v1574 = vadd.f32 %v1523, 1.0
        %v1575 = vadd.f32 %v1525, 1.0
        %v1576 = vadd.f32 %v1527, 1.0
        %v1577 = vadd.f32 %v1529, 1.0
        %v1578 = vadd.f32 %v1531, 1.0
        %v1579 = vadd.f32 %v1533, 1.0
        %v1580 = vadd.f32 %v1535, 1.0
        %v1581 = vadd.f32 %v1537, 1.0
        %v1582 = vadd.f32 %v1539, 1.0
        %v1583 = vadd.f32 %v1541, 1.0
        %v1584 = vadd.f32 %v1543, 1.0
        %v1585 = vadd.f32 %v1545, 1.0
        %v1586 = vadd.f32 %v1547, 1.0
        %v1587 = vadd.f32 %v1549, 1.0
        %v1588 = vadd.f32 %v1551, 1.0
        %v1589 = vadd.f32 %v1553, 1.0
        %v1590 = vadd.f32 %v1555, 1.0
        %v1591 = vadd.f32 %v1557, 1.0
        %v1592 = vadd.f32 %v1559, 1.0
        %v1593 = vadd.f32 %v1561, 1.0
        %v1594 = vrcp.pop %v1562
        %v1595 = vmul.f32 1.0, %v1594
        %v1596 = vrcp.pop %v1563
        %v1597 = vmul.f32 1.0, %v1596
        %v1598 = vrcp.pop %v1564
        %v1599 = vmul.f32 1.0, %v1598
        %v1600 = vrcp.pop %v1565
        %v1601 = vmul.f32 1.0, %v1600
        %v1602 = vrcp.pop %v1566
        %v1603 = vmul.f32 1.0, %v1602
        %v1604 = vrcp.pop %v1567
        %v1605 = vmul.f32 1.0, %v1604
        %v1606 = vrcp.pop %v1568
        %v1607 = vmul.f32 1.0, %v1606
        %v1608 = vrcp.pop %v1569
        %v1609 = vmul.f32 1.0, %v1608
        %v1610 = vrcp.pop %v1570
        %v1611 = vmul.f32 1.0, %v1610
        %v1612 = vrcp.pop %v1571
        %v1613 = vmul.f32 1.0, %v1612
        %v1614 = vrcp.pop %v1572
        %v1615 = vmul.f32 1.0, %v1614
        %v1616 = vrcp.pop %v1573
        %v1617 = vmul.f32 1.0, %v1616
        %v1618 = vrcp.pop %v1574
        %v1619 = vmul.f32 1.0, %v1618
        %v1620 = vrcp.pop %v1575
        %v1621 = vmul.f32 1.0, %v1620
        %v1622 = vrcp.pop %v1576
        %v1623 = vmul.f32 1.0, %v1622
        %v1624 = vrcp.pop %v1577
        %v1625 = vmul.f32 1.0, %v1624
        %v1626 = vrcp.pop %v1578
        %v1627 = vmul.f32 1.0, %v1626
        %v1628 = vrcp.pop %v1579
        %v1629 = vmul.f32 1.0, %v1628
        %v1630 = vrcp.pop %v1580
        %v1631 = vmul.f32 1.0, %v1630
        %v1632 = vrcp.pop %v1581
        %v1633 = vmul.f32 1.0, %v1632
        %v1634 = vrcp.pop %v1582
        %v1635 = vmul.f32 1.0, %v1634
        %v1636 = vrcp.pop %v1583
        %v1637 = vmul.f32 1.0, %v1636
        %v1638 = vrcp.pop %v1584
        %v1639 = vmul.f32 1.0, %v1638
        %v1640 = vrcp.pop %v1585
        %v1641 = vmul.f32 1.0, %v1640
        %v1642 = vrcp.pop %v1586
        %v1643 = vmul.f32 1.0, %v1642
        %v1644 = vrcp.pop %v1587
        %v1645 = vmul.f32 1.0, %v1644
        %v1646 = vrcp.pop %v1588
        %v1647 = vmul.f32 1.0, %v1646
        %v1648 = vrcp.pop %v1589
        %v1649 = vmul.f32 1.0, %v1648
        %v1650 = vrcp.pop %v1590
        %v1651 = vmul.f32 1.0, %v1650
        %v1652 = vrcp.pop %v1591
        %v1653 = vmul.f32 1.0, %v1652
        %v1654 = vrcp.pop %v1592
        %v1655 = vmul.f32 1.0, %v1654
        %v1656 = vrcp.pop %v1593
        %v1657 = vmul.f32 1.0, %v1656
        %v1658 = vmul.f32 %v1340, %v1595
        %v1659 = vmul.f32 %v1343, %v1597
        %v1660 = vmul.f32 %v1348, %v1599
        %v1661 = vmul.f32 %v1351, %v1601
        %v1662 = vmul.f32 %v1356, %v1603
        %v1663 = vmul.f32 %v1359, %v1605
        %v1664 = vmul.f32 %v1364, %v1607
        %v1665 = vmul.f32 %v1367, %v1609
        %v1666 = vmul.f32 %v1372, %v1611
        %v1667 = vmul.f32 %v1375, %v1613
        %v1668 = vmul.f32 %v1380, %v1615
        %v1669 = vmul.f32 %v1383, %v1617
        %v1670 = vmul.f32 %v1388, %v1619
        %v1671 = vmul.f32 %v1391, %v1621
        %v1672 = vmul.f32 %v1396, %v1623
        %v1673 = vmul.f32 %v1399, %v1625
        %v1674 = vmul.f32 %v1404, %v1627
        %v1675 = vmul.f32 %v1407, %v1629
        %v1676 = vmul.f32 %v1412, %v1631
        %v1677 = vmul.f32 %v1415, %v1633
        %v1678 = vmul.f32 %v1420, %v1635
        %v1679 = vmul.f32 %v1423, %v1637
        %v1680 = vmul.f32 %v1428, %v1639
        %v1681 = vmul.f32 %v1431, %v1641
        %v1682 = vmul.f32 %v1436, %v1643
        %v1683 = vmul.f32 %v1439, %v1645
        %v1684 = vmul.f32 %v1444, %v1647
        %v1685 = vmul.f32 %v1447, %v1649
        %v1686 = vmul.f32 %v1452, %v1651
        %v1687 = vmul.f32 %v1455, %v1653
        %v1688 = vmul.f32 %v1460, %v1655
        %v1689 = vmul.f32 %v1463, %v1657
        %1690 = vxpose.xlu0.b32.start [1/16] %v1658, 128
        %1691 = vxpose.xlu0.b32.cont [2/16] %v1659, 128
        %1692 = vxpose.xlu0.b32.cont [3/16] %v1660, 128
        %1693 = vxpose.xlu0.b32.cont [4/16] %v1661, 128
        %1694 = vxpose.xlu0.b32.cont [5/16] %v1662, 128
        %1695 = vxpose.xlu0.b32.cont [6/16] %v1663, 128
        %1696 = vxpose.xlu0.b32.cont [7/16] %v1664, 128
        %1697 = vxpose.xlu0.b32.cont [8/16] %v1665, 128
        %1698 = vxpose.xlu0.b32.cont [9/16] %v1666, 128
        %1699 = vxpose.xlu0.b32.cont [10/16] %v1667, 128
        %1700 = vxpose.xlu0.b32.cont [11/16] %v1668, 128
        %1701 = vxpose.xlu0.b32.cont [12/16] %v1669, 128
        %1702 = vxpose.xlu0.b32.cont [13/16] %v1670, 128
        %1703 = vxpose.xlu0.b32.cont [14/16] %v1671, 128
        %1704 = vxpose.xlu0.b32.cont [15/16] %v1672, 128
        %1705 = vxpose.xlu0.b32.end [16/16] %v1673, 128
        %v1706 = vpop.trf.xlu0
        %v1707 = vpop.trf.xlu0
        %v1708 = vpop.trf.xlu0
        %v1709 = vpop.trf.xlu0
        %v1710 = vpop.trf.xlu0
        %v1711 = vpop.trf.xlu0
        %v1712 = vpop.trf.xlu0
        %v1713 = vpop.trf.xlu0
        %v1714 = vpop.trf.xlu0
        %v1715 = vpop.trf.xlu0
        %v1716 = vpop.trf.xlu0
        %v1717 = vpop.trf.xlu0
        %v1718 = vpop.trf.xlu0
        %v1719 = vpop.trf.xlu0
        %v1720 = vpop.trf.xlu0
        %v1721 = vpop.trf.xlu0
        %1722 = vxpose.xlu0.b32.start [1/16] %v1674, 128
        %1723 = vxpose.xlu0.b32.cont [2/16] %v1675, 128
        %1724 = vxpose.xlu0.b32.cont [3/16] %v1676, 128
        %1725 = vxpose.xlu0.b32.cont [4/16] %v1677, 128
        %1726 = vxpose.xlu0.b32.cont [5/16] %v1678, 128
        %1727 = vxpose.xlu0.b32.cont [6/16] %v1679, 128
        %1728 = vxpose.xlu0.b32.cont [7/16] %v1680, 128
        %1729 = vxpose.xlu0.b32.cont [8/16] %v1681, 128
        %1730 = vxpose.xlu0.b32.cont [9/16] %v1682, 128
        %1731 = vxpose.xlu0.b32.cont [10/16] %v1683, 128
        %1732 = vxpose.xlu0.b32.cont [11/16] %v1684, 128
        %1733 = vxpose.xlu0.b32.cont [12/16] %v1685, 128
        %1734 = vxpose.xlu0.b32.cont [13/16] %v1686, 128
        %1735 = vxpose.xlu0.b32.cont [14/16] %v1687, 128
        %1736 = vxpose.xlu0.b32.cont [15/16] %v1688, 128
        %1737 = vxpose.xlu0.b32.end [16/16] %v1689, 128
        %v1738 = vpop.trf.xlu0
        %v1739 = vpop.trf.xlu0
        %v1740 = vpop.trf.xlu0
        %v1741 = vpop.trf.xlu0
        %v1742 = vpop.trf.xlu0
        %v1743 = vpop.trf.xlu0
        %v1744 = vpop.trf.xlu0
        %v1745 = vpop.trf.xlu0
        %v1746 = vpop.trf.xlu0
        %v1747 = vpop.trf.xlu0
        %v1748 = vpop.trf.xlu0
        %v1749 = vpop.trf.xlu0
        %v1750 = vpop.trf.xlu0
        %v1751 = vpop.trf.xlu0
        %v1752 = vpop.trf.xlu0
        %v1753 = vpop.trf.xlu0
        %v1754 = vld [vmem:[%s7] sm:$0xff]
        %v1755 = vld [vmem:[%s7 + $0x8] sm:$0xff]
        %v1756 = vld [vmem:[%s7 + $0x10] sm:$0xff]
        %v1757 = vld [vmem:[%s7 + $0x18] sm:$0xff]
        %v1758 = vld [vmem:[%s7 + $0x20] sm:$0xff]
        %v1759 = vld [vmem:[%s7 + $0x28] sm:$0xff]
        %v1760 = vld [vmem:[%s7 + $0x30] sm:$0xff]
        %v1761 = vld [vmem:[%s7 + $0x38] sm:$0xff]
        %v1762 = vld [vmem:[%s7 + $0x40] sm:$0xff]
        %v1763 = vld [vmem:[%s7 + $0x48] sm:$0xff]
        %v1764 = vld [vmem:[%s7 + $0x50] sm:$0xff]
        %v1765 = vld [vmem:[%s7 + $0x58] sm:$0xff]
        %v1766 = vld [vmem:[%s7 + $0x60] sm:$0xff]
        %v1767 = vld [vmem:[%s7 + $0x68] sm:$0xff]
        %v1768 = vld [vmem:[%s7 + $0x70] sm:$0xff]
        %v1769 = vld [vmem:[%s7 + $0x78] sm:$0xff]
        %1771 = vset.pattern.permute.xlu0 0
        %1772 = vperm.xlu0 %1771, %v1754
        %v1773 = vpop.permute.xlu0 %1772
        %1776 = vset.pattern.permute.xlu0 0
        %1777 = vperm.xlu0 %1776, %v1755
        %v1778 = vpop.permute.xlu0 %1777
        %1781 = vset.pattern.permute.xlu0 0
        %1782 = vperm.xlu0 %1781, %v1756
        %v1783 = vpop.permute.xlu0 %1782
        %1786 = vset.pattern.permute.xlu0 0
        %1787 = vperm.xlu0 %1786, %v1757
        %v1788 = vpop.permute.xlu0 %1787
        %1791 = vset.pattern.permute.xlu0 0
        %1792 = vperm.xlu0 %1791, %v1758
        %v1793 = vpop.permute.xlu0 %1792
        %1796 = vset.pattern.permute.xlu0 0
        %1797 = vperm.xlu0 %1796, %v1759
        %v1798 = vpop.permute.xlu0 %1797
        %1801 = vset.pattern.permute.xlu0 0
        %1802 = vperm.xlu0 %1801, %v1760
        %v1803 = vpop.permute.xlu0 %1802
        %1806 = vset.pattern.permute.xlu0 0
        %1807 = vperm.xlu0 %1806, %v1761
        %v1808 = vpop.permute.xlu0 %1807
        %1811 = vset.pattern.permute.xlu0 0
        %1812 = vperm.xlu0 %1811, %v1762
        %v1813 = vpop.permute.xlu0 %1812
        %1816 = vset.pattern.permute.xlu0 0
        %1817 = vperm.xlu0 %1816, %v1763
        %v1818 = vpop.permute.xlu0 %1817
        %1821 = vset.pattern.permute.xlu0 0
        %1822 = vperm.xlu0 %1821, %v1764
        %v1823 = vpop.permute.xlu0 %1822
        %1826 = vset.pattern.permute.xlu0 0
        %1827 = vperm.xlu0 %1826, %v1765
        %v1828 = vpop.permute.xlu0 %1827
        %1831 = vset.pattern.permute.xlu0 0
        %1832 = vperm.xlu0 %1831, %v1766
        %v1833 = vpop.permute.xlu0 %1832
        %1836 = vset.pattern.permute.xlu0 0
        %1837 = vperm.xlu0 %1836, %v1767
        %v1838 = vpop.permute.xlu0 %1837
        %1841 = vset.pattern.permute.xlu0 0
        %1842 = vperm.xlu0 %1841, %v1768
        %v1843 = vpop.permute.xlu0 %1842
        %1846 = vset.pattern.permute.xlu0 0
        %1847 = vperm.xlu0 %1846, %v1769
        %v1848 = vpop.permute.xlu0 %1847
        %v1850 = vmul.f32 %v1706, %v1773
        %v1851 = vmul.f32 %v1738, %v1773
        %v1852 = vmul.f32 %v1707, %v1778
        %v1853 = vmul.f32 %v1739, %v1778
        %v1854 = vmul.f32 %v1708, %v1783
        %v1855 = vmul.f32 %v1740, %v1783
        %v1856 = vmul.f32 %v1709, %v1788
        %v1857 = vmul.f32 %v1741, %v1788
        %v1858 = vmul.f32 %v1710, %v1793
        %v1859 = vmul.f32 %v1742, %v1793
        %v1860 = vmul.f32 %v1711, %v1798
        %v1861 = vmul.f32 %v1743, %v1798
        %v1862 = vmul.f32 %v1712, %v1803
        %v1863 = vmul.f32 %v1744, %v1803
        %v1864 = vmul.f32 %v1713, %v1808
        %v1865 = vmul.f32 %v1745, %v1808
        %v1866 = vmul.f32 %v1714, %v1813
        %v1867 = vmul.f32 %v1746, %v1813
        %v1868 = vmul.f32 %v1715, %v1818
        %v1869 = vmul.f32 %v1747, %v1818
        %v1870 = vmul.f32 %v1716, %v1823
        %v1871 = vmul.f32 %v1748, %v1823
        %v1872 = vmul.f32 %v1717, %v1828
        %v1873 = vmul.f32 %v1749, %v1828
        %v1874 = vmul.f32 %v1718, %v1833
        %v1875 = vmul.f32 %v1750, %v1833
        %v1876 = vmul.f32 %v1719, %v1838
        %v1877 = vmul.f32 %v1751, %v1838
        %v1878 = vmul.f32 %v1720, %v1843
        %v1879 = vmul.f32 %v1752, %v1843
        %v1880 = vmul.f32 %v1721, %v1848
        %v1881 = vmul.f32 %v1753, %v1848
        %v1882 = vadd.f32 %v1850, %v1852
        %v1883 = vadd.f32 %v1882, %v1854
        %v1884 = vadd.f32 %v1883, %v1856
        %v1885 = vadd.f32 %v1884, %v1858
        %v1886 = vadd.f32 %v1885, %v1860
        %v1887 = vadd.f32 %v1886, %v1862
        %v1888 = vadd.f32 %v1887, %v1864
        %v1889 = vadd.f32 %v1888, %v1866
        %v1890 = vadd.f32 %v1889, %v1868
        %v1891 = vadd.f32 %v1890, %v1870
        %v1892 = vadd.f32 %v1891, %v1872
        %v1893 = vadd.f32 %v1892, %v1874
        %v1894 = vadd.f32 %v1893, %v1876
        %v1895 = vadd.f32 %v1894, %v1878
        %v1896 = vadd.f32 %v1895, %v1880
        %v1897 = vrot.slane %v1896, 4
        %v1898 = vadd.f32 %v1896, %v1897
        %v1899 = vrot.slane %v1898, 2
        %v1900 = vadd.f32 %v1898, %v1899
        %v1901 = vrot.slane %v1900, 1
        %v1902 = vadd.f32 %v1900, %v1901
        %v1903 = vadd.f32 %v1851, %v1853
        %v1904 = vadd.f32 %v1903, %v1855
        %v1905 = vadd.f32 %v1904, %v1857
        %v1906 = vadd.f32 %v1905, %v1859
        %v1907 = vadd.f32 %v1906, %v1861
        %v1908 = vadd.f32 %v1907, %v1863
        %v1909 = vadd.f32 %v1908, %v1865
        %v1910 = vadd.f32 %v1909, %v1867
        %v1911 = vadd.f32 %v1910, %v1869
        %v1912 = vadd.f32 %v1911, %v1871
        %v1913 = vadd.f32 %v1912, %v1873
        %v1914 = vadd.f32 %v1913, %v1875
        %v1915 = vadd.f32 %v1914, %v1877
        %v1916 = vadd.f32 %v1915, %v1879
        %v1917 = vadd.f32 %v1916, %v1881
        %v1918 = vrot.slane %v1917, 4
        %v1919 = vadd.f32 %v1917, %v1918
        %v1920 = vrot.slane %v1919, 2
        %v1921 = vadd.f32 %v1919, %v1920
        %v1922 = vrot.slane %v1921, 1
        %v1923 = vadd.f32 %v1921, %v1922
        %s1924 = sld [smem:[#allocation2]]
        %v1925 = vstv %s1924
        %v1926 = vadd.f32 %v1902, %v1925
        %v1927 = vadd.f32 %v1923, %v1925
        %v1928 = vxor.u32 %v1926, 2147483648
        %v1929 = vxor.u32 %v1927, 2147483648
        %v1930 = vmul.f32 %v1928, 1.442695
        %v1931 = vpow.pop %v1930
        %v1932 = vmul.f32 %v1929, 1.442695
        %v1933 = vpow.pop %v1932
        %v1934 = vadd.f32 %v1931, 1.0
        %v1935 = vadd.f32 %v1933, 1.0
        %v1936 = vrcp.pop %v1934
        %v1937 = vmul.f32 1.0, %v1936
        %v1938 = vrcp.pop %v1935
        %v1939 = vmul.f32 1.0, %v1938
        %v1942 = vcombine.low %v1937, %v1939
        %v1944 = vunpack.c.l.s4 1966171168
        %v1945 = vunpack.c.0.s8 %v1944
        %v1946 = vlaneseq
        %v1947 = vshrl.u32 %v1946, 7
        %v1948 = vsub.s32 %v1945, %v1947
        %v1949 = vrot.slane %v1942, %v1948
        %v1951 = vunpack.c.l.s4 1966171168
        %v1952 = vunpack.c.0.s8 %v1951
        %v1953 = vlaneseq
        %v1954 = vshrl.u32 %v1953, 7
        %v1955 = vsub.s32 %v1952, %v1954
        %v1956 = vrot.slane %v1949, %v1955
        %v1958 = vlaneseq
        %vm1959 = vcmp.ge.s32.totalorder %v1958, 0
        %vm1960 = vcmp.lt.s32.totalorder %v1958, 256
        %vm1961 = vmand %vm1959, %vm1960
        %1962 = vst.msk [vmem:[%s405] sm:$0x3] %vm1961, %v1956
        %s1963 = sand.u32 %s237, 1
        %s1964 = scalar_lea.sflag [#allocation5], %s1963
        %s1965 = sand.u32 %s237, 1
        %s1966 = smul.addr %s1965, 2
        %s1967 = scalar_lea.vmem [#allocation9], %s1966
        // Predicated region
        $region69: #{tpu_custom_call.1} parent=55 // pred_check
          %p1968 = pneg %p247
        $region70: #{tpu_custom_call.1} parent=55 // pred_check_branch
          %1970 = sbr.rel (%p1968) target = $region72
        $region71: #{tpu_custom_call.1} parent=55 // pred_region
          %s1972 = ssub.s32 32, 32
          %1973 = vsyncadd %s1964, %s1972
          %s1974 = smul.addr %s30, 2
          %s1975 = smul.addr %s1974, 16
          %s1976 = scalar_lea.hbm %s9, %s1975
          %s1978 = sshll.u32 %s1967, 4
          %s1979 = int_to_ptr.vmem [resolvable:$true] %s1978
          %1981 = dma.vmem_to_hbm [thread:$0]  %s1979, 32, %s1976, %s1964
        $region72: #{tpu_custom_call.1} parent=55 // pred_fallthru
          _
      $region56: #{tpu_custom_call.1} parent=5 // pred_fallthru
        _
      %p1982 = scmp.le.s32.totalorder 2, %s25
      // Predicated region
      $region73: #{tpu_custom_call.1} parent=5 // pred_check
        %p1983 = pneg %p1982
      $region74: #{tpu_custom_call.1} parent=5 // pred_check_branch
        %1985 = sbr.rel (%p1983) target = $region76
      $region75: #{tpu_custom_call.1} parent=5 // pred_region
        %s1986 = ssub.s32 %s25, 2
        // Predicated region
        $region77: #{tpu_custom_call.1} parent=75 // pred_check
          %p1987 = pneg %p253
        $region78: #{tpu_custom_call.1} parent=75 // pred_check_branch
          %1989 = sbr.rel (%p1987) target = $region80
        $region79: #{tpu_custom_call.1} parent=75 // pred_region
          %s1990 = sand.u32 %s238, 1
          %s1991 = scalar_lea.sflag [#allocation5], %s1990
          %s1992 = sand.u32 %s238, 1
          %s1993 = smul.addr %s1992, 2
          %s1994 = scalar_lea.vmem [#allocation9], %s1993
          %1995 = dma.done %s1991, 32
        $region80: #{tpu_custom_call.1} parent=75 // pred_fallthru
          _
      $region76: #{tpu_custom_call.1} parent=5 // pred_fallthru
        _
    $region6: #{tpu_custom_call.1} parent=1 // loop_footer
      %s29 = sadd.s32 1, %s25
    $region7: #{tpu_custom_call.1} parent=1 // loop_footer_branch
      %24 = sbr.rel target = $region3
    $region8: #{tpu_custom_call.1} parent=1 // loop_exit
      _
    %1996 = vsyncpa [#allocation4], 1
    %s1997 = scalar_lea.sflag [#allocation4], 1
    %1998 = vsyncpa %s1997, 1
    %1999 = vsyncpa [#allocation7], 1
    %s2000 = scalar_lea.sflag [#allocation7], 1
    %2001 = vsyncpa %s2000, 1
    %2002 = vsyncpa [#allocation5], 1
    %s2003 = scalar_lea.sflag [#allocation5], 1
    %2004 = vsyncpa %s2003, 1

</llo_original>
